<compile_context>
chip_gen: v7x
topology: tpu7x:2x2x1
jax: 0.10.0
libtpu: 0.0.40
codegen_flags: <defaults>
</compile_context>

<pallas_src>
import math

import jax
import jax.numpy as jnp
from jax.experimental import pallas as pl
from jax.experimental.pallas import tpu as pltpu

FEATURE_DIM = 32
IDENTITY_DIM = 16
NUM_HEADS = 8
HEAD_DIM = FEATURE_DIM // NUM_HEADS
LN_EPS = 1e-5

# Bias/gamma/beta column indices inside the packed (F, 11) bundle
# (columns 0:3 hold W_i2f^T, then these 8 vectors).
B_I2F, G1, BE1, BQ, BO, G2, BE2, B2 = range(8)

PACKED_ORDER = ("vecs", "wqo", "w1b1", "w2t", "wf2i")


# ----------------------------------------------------------------------------
# math helpers
# ----------------------------------------------------------------------------
def _layer_norm(x, gamma, beta):
    """LayerNorm over the LAST axis (reference / natural layout)."""
    mu = jnp.mean(x, axis=-1, keepdims=True)
    var = jnp.mean(jnp.square(x - mu), axis=-1, keepdims=True)
    return (x - mu) * jax.lax.rsqrt(var + LN_EPS) * gamma + beta


def _layer_norm_t(x, gamma_col, beta_col):
    """LayerNorm over the FEATURE (sublane) axis of an (F, T) tile."""
    mu = jnp.mean(x, axis=0, keepdims=True)
    xc = x - mu
    var = jnp.mean(xc * xc, axis=0, keepdims=True)
    return xc * jax.lax.rsqrt(var + LN_EPS) * gamma_col + beta_col


def _gelu_exact(x):
    # nn.GELU() default = exact erf-based GELU (kept for semantic fidelity).
    return 0.5 * x * (1.0 + jax.lax.erf(x * (1.0 / math.sqrt(2.0))))


# ----------------------------------------------------------------------------
# fused kernel: one (batch, HW-tile) block per grid step; activations live as
# (F, tile) / (4F, tile) with pixels on the 128-wide lane axis.
# ----------------------------------------------------------------------------
def identity_injection_kernel(x_ref,                       # (1, 3, T)
                              kbd_ref, vbd_ref,            # (1, HN, F), (1, F, HN)
                              vecs_ref,                    # (F, 11)
                              wqo_ref,                     # (2F, F)  = [Wq^T; (s*Wo)^T]
                              w1b1_ref,                    # (4F, F+1) = [W1^T | b1]
                              w2t_ref,                     # (F, 4F)
                              wf2i_ref,                    # (3, F+1)  = [Wf2i^T | b]
                              out_ref):                    # (1, 3, T)
    F = FEATURE_DIM
    x = x_ref[0]                                  # (3, T)
    kbd = kbd_ref[0]                              # (HN, F)  softmax scale pre-folded
    vbd = vbd_ref[0]                              # (F, HN)
    vecs = vecs_ref[...]                          # (F, 11)
    w_i2f = vecs[:, 0:3]                          # (F, 3)

    def col(j):
        return vecs[:, 3 + j:4 + j]               # (F, 1)

    # img_to_feature: 1x1 conv == per-pixel linear over channels.
    h = jnp.dot(w_i2f, x, preferred_element_type=jnp.float32) + col(B_I2F)      # (F, T)

    # norm1 + query projection.
    nh = _layer_norm_t(h, col(G1), col(BE1))
    wqo = wqo_ref[...]
    q = jnp.dot(wqo[0:F], nh, preferred_element_type=jnp.float32) + col(BQ)      # (F, T)

    # Multi-head cross attention as two block-diagonal MXU matmuls.
    hn = kbd.shape[0]
    nid = hn // NUM_HEADS
    tsz = q.shape[-1]
    s = jnp.dot(kbd, q, preferred_element_type=jnp.float32)                      # (HN, T)
    # Per-head softmax: heads are 8-row (nid) sublane groups -> tile-aligned
    # reshape to (NUM_HEADS, nid, T) and reduce over the sublane axis.
    s3 = s.reshape(NUM_HEADS, nid, tsz)
    s3 = s3 - jnp.max(s3, axis=1, keepdims=True)
    p3 = jnp.exp(s3)
    inv = 1.0 / jnp.sum(p3, axis=1, keepdims=True)          # exact f32 reciprocal
    p = (p3 * inv).reshape(hn, tsz)
    attn = jnp.dot(vbd, p, preferred_element_type=jnp.float32)                   # (F, T)
    attn = jnp.dot(wqo[F:2 * F], attn, preferred_element_type=jnp.float32) + col(BO)

    # residual injection (strength already folded into Wo / b_o)
    h = h + attn

    # norm2 + feed-forward + residual
    nh2 = _layer_norm_t(h, col(G2), col(BE2))
    w1b1 = w1b1_ref[...]
    ff = jnp.dot(w1b1[:, :F], nh2, preferred_element_type=jnp.float32) + w1b1[:, F:]  # (4F, T)
    ff = _gelu_exact(ff)
    ff = jnp.dot(w2t_ref[...], ff, preferred_element_type=jnp.float32) + col(B2)      # (F, T)
    h = h + ff

    # feature_to_img: 1x1 conv back to 3 channels (lane-dense output block).
    wf2i = wf2i_ref[...]
    out = jnp.dot(wf2i[:, :F], h, preferred_element_type=jnp.float32) + wf2i[:, F:]   # (3, T)
    out_ref[0] = out.astype(out_ref.dtype)


# ----------------------------------------------------------------------------
# parameter packing (natural PyTorch-like layout -> kernel layout)
# ----------------------------------------------------------------------------
def pack_params(p, strength):
    t = jnp.transpose
    s = jnp.float32(strength)
    wo_s = p["wo"] * s
    bo_s = p["bo"] * s
    vecs = jnp.concatenate(
        [t(p["w_i2f"]),                                           # (F, 3)
         t(p["b_i2f"]), t(p["g1"]), t(p["be1"]), t(p["bq"]),
         t(bo_s), t(p["g2"]), t(p["be2"]), t(p["b2"])], axis=1)   # (F, 11)
    return {
        "vecs": vecs,
        "wqo": jnp.concatenate([t(p["wq"]), t(wo_s)], axis=0),    # (2F, F)
        "w1b1": jnp.concatenate([t(p["w1"]), t(p["b1"])], axis=1),# (4F, F+1)
        "w2t": t(p["w2"]),                                        # (F, 4F)
        "wf2i": jnp.concatenate([t(p["w_f2i"]), t(p["b_f2i"])], axis=1),  # (3, F+1)
    }


_TILE_CANDIDATES = (4096, 2048, 1024, 512, 256, 128)


def _pad_and_tile(hw):
    """Return (padded HW, lane-dense tile).  Never emits a non-128 block."""
    for t in _TILE_CANDIDATES:
        if hw % t == 0:
            return hw, t
    tile = 512 if hw >= 512 else 128
    return ((hw + tile - 1) // tile) * tile, tile


# ----------------------------------------------------------------------------
# wrapper
# ----------------------------------------------------------------------------
def identity_injection_forward(x_nchw, identity_tokens, params, strength=1.0):
    """Image-like path of IdentityInjectionLayer.forward (input NCHW, C=3)."""
    B, Cin, H, W = x_nchw.shape
    assert Cin == 3, "image-like path requires 3 input channels"
    F = FEATURE_DIM
    HW = H * W

    hw_pad, tile = _pad_and_tile(HW)
    n_tiles = hw_pad // tile

    # Pure reshapes only -- no NCHW<->NHWC permute of pixel data.
    x_seq = x_nchw.reshape(B, Cin, HW)
    if hw_pad != HW:
        x_seq = jnp.pad(x_seq, ((0, 0), (0, 0), (0, hw_pad - HW)))

    # ---- hoisted identity-token path (depends only on batch; tiny) ----
    idt = identity_tokens.astype(jnp.float32)
    if idt.shape[-1] != F:
        idt = idt @ params["w_idp"] + params["b_idp"]                       # (B, Nid, F)
    Nid = idt.shape[1]
    HN = NUM_HEADS * Nid
    k = (idt @ params["wk"] + params["bk"]) * (1.0 / math.sqrt(HEAD_DIM))   # scale folded
    v = idt @ params["wv"] + params["bv"]
    eye_h = jnp.eye(NUM_HEADS, dtype=jnp.float32)
    k_h = k.reshape(B, Nid, NUM_HEADS, HEAD_DIM)
    v_h = v.reshape(B, Nid, NUM_HEADS, HEAD_DIM)
    # Block-diagonal K / V so per-head attention becomes two plain matmuls.
    k_bd = jnp.einsum("bngd,hg->bhngd", k_h, eye_h).reshape(B, HN, F)       # (B, HN, F)
    v_bd = jnp.einsum("bngd,hg->bgdhn", v_h, eye_h).reshape(B, F, HN)       # (B, F, HN)

    packed = pack_params(params, strength)

    def const_spec(arr):
        return pl.BlockSpec(arr.shape, lambda b, t: (0, 0))

    in_specs = [
        pl.BlockSpec((1, Cin, tile), lambda b, t: (b, 0, t)),   # x tile
        pl.BlockSpec((1, HN, F), lambda b, t: (b, 0, 0)),       # block-diag K (per batch)
        pl.BlockSpec((1, F, HN), lambda b, t: (b, 0, 0)),       # block-diag V (per batch)
    ] + [const_spec(packed[name]) for name in PACKED_ORDER]

    flops_px = 2 * (3 * F + F * F + HN * F + F * HN + F * F + 8 * F * F + 3 * F)
    cost = pl.CostEstimate(
        flops=int(B * hw_pad * flops_px),
        transcendentals=int(B * hw_pad * (HN + 4 * F + 4)),
        bytes_accessed=int(B * hw_pad * 2 * Cin * 4),
    )

    out_seq = pl.pallas_call(
        identity_injection_kernel,
        out_shape=jax.ShapeDtypeStruct((B, Cin, hw_pad), x_nchw.dtype),
        grid=(B, n_tiles),
        in_specs=in_specs,
        out_specs=pl.BlockSpec((1, Cin, tile), lambda b, t: (b, 0, t)),
        compiler_params=pltpu.CompilerParams(
            dimension_semantics=("parallel", "parallel"),
            vmem_limit_bytes=40 * 1024 * 1024),
        cost_estimate=cost,
    )(x_seq, k_bd, v_bd, *[packed[name] for name in PACKED_ORDER])

    return out_seq[:, :, :HW].reshape(B, Cin, H, W)


# ----------------------------------------------------------------------------
# parameter init (natural layout, mirrors the PyTorch module's tensors)
# ----------------------------------------------------------------------------
def init_params(key):
    keys = jax.random.split(key, 32)
    F, Did = FEATURE_DIM, IDENTITY_DIM

    def lin(k, fan_in, fan_out):
        return (jax.random.normal(k, (fan_in, fan_out), jnp.float32)
                / math.sqrt(fan_in)).astype(jnp.float32)

    def vec(k, dim, scale=0.02):
        return (scale * jax.random.normal(k, (1, dim), jnp.float32)).astype(jnp.float32)

    p = {}
    p["w_i2f"] = lin(keys[0], 3, F);        p["b_i2f"] = vec(keys[1], F)
    p["w_idp"] = lin(keys[2], Did, F);      p["b_idp"] = vec(keys[3], F)
    p["g1"] = jnp.ones((1, F), jnp.float32) + vec(keys[4], F)
    p["be1"] = vec(keys[5], F)
    p["wq"] = lin(keys[6], F, F);           p["bq"] = vec(keys[7], F)
    p["wk"] = lin(keys[8], F, F);           p["bk"] = vec(keys[9], F)
    p["wv"] = lin(keys[10], F, F);          p["bv"] = vec(keys[11], F)
    p["wo"] = lin(keys[12], F, F);          p["bo"] = vec(keys[13], F)
    p["g2"] = jnp.ones((1, F), jnp.float32) + vec(keys[14], F)
    p["be2"] = vec(keys[15], F)
    p["w1"] = lin(keys[16], F, 4 * F);      p["b1"] = vec(keys[17], 4 * F)
    p["w2"] = lin(keys[18], 4 * F, F);      p["b2"] = vec(keys[19], F)
    p["w_f2i"] = lin(keys[20], F, 3);       p["b_f2i"] = vec(keys[21], 3)
    return p


# ----------------------------------------------------------------------------
# plain-JAX reference matching the PyTorch forward (image-like path)
# ----------------------------------------------------------------------------
def reference_forward(x_nchw, idt, params, strength):
    B, Cin, H, W = x_nchw.shape
    x = jnp.transpose(x_nchw, (0, 2, 3, 1)).reshape(B, H * W, Cin)
    h = x @ params["w_i2f"] + params["b_i2f"]
    if idt.shape[-1] != FEATURE_DIM:
        idt = idt @ params["w_idp"] + params["b_idp"]
    nh = _layer_norm(h, params["g1"], params["be1"])
    q = nh @ params["wq"] + params["bq"]
    k = idt @ params["wk"] + params["bk"]
    v = idt @ params["wv"] + params["bv"]

    def split(t):
        b, s, _ = t.shape
        return t.reshape(b, s, NUM_HEADS, HEAD_DIM).transpose(0, 2, 1, 3)

    qh, kh, vh = split(q), split(k), split(v)
    s = jnp.einsum("bhqd,bhkd->bhqk", qh, kh) / math.sqrt(HEAD_DIM)
    p = jax.nn.softmax(s, axis=-1)
    o = jnp.einsum("bhqk,bhkd->bhqd", p, vh).transpose(0, 2, 1, 3).reshape(
        B, H * W, FEATURE_DIM)
    attn = o @ params["wo"] + params["bo"]
    h = h + attn * strength
    nh2 = _layer_norm(h, params["g2"], params["be2"])
    ff = nh2 @ params["w1"] + params["b1"]
    ff = _gelu_exact(ff)
    ff = ff @ params["w2"] + params["b2"]
    h = h + ff
    out = h @ params["w_f2i"] + params["b_f2i"]
    return jnp.transpose(out.reshape(B, H, W, Cin), (0, 3, 1, 2))


if __name__ == "__main__":
    key = jax.random.PRNGKey(0)
    k_param, k_x, k_id = jax.random.split(key, 3)

    B, H, W = 2, 16, 16
    N_ID_TOKENS = 8
    STRENGTH = 0.75

    params = init_params(k_param)
    x = jax.random.normal(k_x, (B, 3, H, W), jnp.float32)                 # NCHW image
    identity_tokens = jax.random.normal(k_id, (B, N_ID_TOKENS, IDENTITY_DIM),
                                        jnp.float32)

    out = jax.block_until_ready(
        identity_injection_forward(x, identity_tokens, params, strength=STRENGTH))
    ref = jax.block_until_ready(
        reference_forward(x, identity_tokens, params, STRENGTH))

    assert out.shape == (B, 3, H, W) and out.dtype == x.dtype
    max_err = float(jnp.max(jnp.abs(out - ref)))
    assert jnp.allclose(out, ref, rtol=1e-3, atol=1e-3), f"max abs err {max_err}"

    # TODO(synk): the ModuleDict of dim-specific input projections (non-image
    # sequence path), the 16384-token chunking loop, and last_attention_map
    # caching are module plumbing not exercised by this image-like forward.
    print("KERNEL_OK")
</pallas_src>

<mosaic_0001>
module attributes {stable_mosaic.version = 11 : i64} {
  func.func @identity_injection_kernel(%arg0: i32, %arg1: i32, %arg2: memref<1x3x256xf32, #tpu.memory_space<vmem>>, %arg3: memref<1x64x32xf32, #tpu.memory_space<vmem>>, %arg4: memref<1x32x64xf32, #tpu.memory_space<vmem>>, %arg5: memref<32x11xf32, #tpu.memory_space<vmem>>, %arg6: memref<64x32xf32, #tpu.memory_space<vmem>>, %arg7: memref<128x33xf32, #tpu.memory_space<vmem>>, %arg8: memref<32x128xf32, #tpu.memory_space<vmem>>, %arg9: memref<3x33xf32, #tpu.memory_space<vmem>>, %arg10: memref<1x3x256xf32, #tpu.memory_space<vmem>>) attributes {dimension_semantics = [#tpu.dimension_semantics<parallel>, #tpu.dimension_semantics<parallel>], iteration_bounds = array<i64: 2, 1>, scalar_prefetch = 0 : i64, scratch_operands = 0 : i64, tpu.core_type = #tpu.core_type<tc>, window_params = [{transform_indices = @transform_0, window_bounds = array<i64: 1, 3, 256>}, {transform_indices = @transform_1, window_bounds = array<i64: 1, 64, 32>}, {transform_indices = @transform_2, window_bounds = array<i64: 1, 32, 64>}, {pipeline_mode = #tpu.pipeline_mode<synchronous>, transform_indices = @transform_3, window_bounds = array<i64: 32, 11>}, {pipeline_mode = #tpu.pipeline_mode<synchronous>, transform_indices = @transform_4, window_bounds = array<i64: 64, 32>}, {pipeline_mode = #tpu.pipeline_mode<synchronous>, transform_indices = @transform_5, window_bounds = array<i64: 128, 33>}, {pipeline_mode = #tpu.pipeline_mode<synchronous>, transform_indices = @transform_6, window_bounds = array<i64: 32, 128>}, {pipeline_mode = #tpu.pipeline_mode<synchronous>, transform_indices = @transform_7, window_bounds = array<i64: 3, 33>}, {transform_indices = @transform_8, window_bounds = array<i64: 1, 3, 256>}]} {
    %c0 = arith.constant 0 : index
    %c0_0 = arith.constant 0 : index
    %c0_1 = arith.constant 0 : index
    %0 = vector.load %arg2[%c0, %c0_0, %c0_1] : memref<1x3x256xf32, #tpu.memory_space<vmem>>, vector<1x3x256xf32>
    %1 = vector.shape_cast %0 : vector<1x3x256xf32> to vector<3x256xf32>
    %c0_2 = arith.constant 0 : index
    %c0_3 = arith.constant 0 : index
    %c0_4 = arith.constant 0 : index
    %2 = vector.load %arg3[%c0_2, %c0_3, %c0_4] : memref<1x64x32xf32, #tpu.memory_space<vmem>>, vector<1x64x32xf32>
    %3 = vector.shape_cast %2 : vector<1x64x32xf32> to vector<64x32xf32>
    %c0_5 = arith.constant 0 : index
    %c0_6 = arith.constant 0 : index
    %c0_7 = arith.constant 0 : index
    %4 = vector.load %arg4[%c0_5, %c0_6, %c0_7] : memref<1x32x64xf32, #tpu.memory_space<vmem>>, vector<1x32x64xf32>
    %5 = vector.shape_cast %4 : vector<1x32x64xf32> to vector<32x64xf32>
    %c0_8 = arith.constant 0 : index
    %c0_9 = arith.constant 0 : index
    %6 = vector.load %arg5[%c0_8, %c0_9] : memref<32x11xf32, #tpu.memory_space<vmem>>, vector<32x11xf32>
    %7 = vector.extract_strided_slice %6 {offsets = [0, 0], sizes = [32, 3], strides = [1, 1]} : vector<32x11xf32> to vector<32x3xf32>
    %cst = arith.constant dense<0.000000e+00> : vector<32x256xf32>
    %8 = tpu.matmul %7, %1, %cst {dimension_numbers = #tpu.dot_dimension_numbers<[1], [0], [0], [1], [0, 0, 1, 1], [], []>} : vector<32x3xf32>, vector<3x256xf32>, vector<32x256xf32> -> vector<32x256xf32>
    %9 = vector.extract_strided_slice %6 {offsets = [0, 3], sizes = [32, 1], strides = [1, 1]} : vector<32x11xf32> to vector<32x1xf32>
    %10 = vector.broadcast %9 : vector<32x1xf32> to vector<32x256xf32>
    %11 = arith.addf %8, %10 : vector<32x256xf32>
    %12 = vector.extract_strided_slice %6 {offsets = [0, 4], sizes = [32, 1], strides = [1, 1]} : vector<32x11xf32> to vector<32x1xf32>
    %13 = vector.extract_strided_slice %6 {offsets = [0, 5], sizes = [32, 1], strides = [1, 1]} : vector<32x11xf32> to vector<32x1xf32>
    %cst_10 = arith.constant dense<0.000000e+00> : vector<256xf32>
    %14 = vector.multi_reduction <add>, %11, %cst_10 [0] : vector<32x256xf32> to vector<256xf32>
    %15 = vector.shape_cast %14 : vector<256xf32> to vector<1x256xf32>
    %cst_11 = arith.constant 3.200000e+01 : f32
    %16 = vector.broadcast %cst_11 : f32 to vector<1x256xf32>
    %17 = arith.divf %15, %16 : vector<1x256xf32>
    %18 = vector.broadcast %17 : vector<1x256xf32> to vector<32x256xf32>
    %19 = arith.subf %11, %18 : vector<32x256xf32>
    %20 = arith.mulf %19, %19 : vector<32x256xf32>
    %cst_12 = arith.constant dense<0.000000e+00> : vector<256xf32>
    %21 = vector.multi_reduction <add>, %20, %cst_12 [0] : vector<32x256xf32> to vector<256xf32>
    %22 = vector.shape_cast %21 : vector<256xf32> to vector<1x256xf32>
    %cst_13 = arith.constant 3.200000e+01 : f32
    %23 = vector.broadcast %cst_13 : f32 to vector<1x256xf32>
    %24 = arith.divf %22, %23 : vector<1x256xf32>
    %cst_14 = arith.constant 9.99999974E-6 : f32
    %25 = vector.broadcast %cst_14 : f32 to vector<1x256xf32>
    %26 = arith.addf %24, %25 : vector<1x256xf32>
    %27 = math.rsqrt %26 : vector<1x256xf32>
    %28 = vector.broadcast %27 : vector<1x256xf32> to vector<32x256xf32>
    %29 = arith.mulf %19, %28 : vector<32x256xf32>
    %30 = vector.broadcast %12 : vector<32x1xf32> to vector<32x256xf32>
    %31 = arith.mulf %29, %30 : vector<32x256xf32>
    %32 = vector.broadcast %13 : vector<32x1xf32> to vector<32x256xf32>
    %33 = arith.addf %31, %32 : vector<32x256xf32>
    %c0_15 = arith.constant 0 : index
    %c0_16 = arith.constant 0 : index
    %34 = vector.load %arg6[%c0_15, %c0_16] : memref<64x32xf32, #tpu.memory_space<vmem>>, vector<64x32xf32>
    %35 = vector.extract_strided_slice %34 {offsets = [0, 0], sizes = [32, 32], strides = [1, 1]} : vector<64x32xf32> to vector<32x32xf32>
    %cst_17 = arith.constant dense<0.000000e+00> : vector<32x256xf32>
    %36 = tpu.matmul %35, %33, %cst_17 {dimension_numbers = #tpu.dot_dimension_numbers<[1], [0], [0], [1], [0, 0, 1, 1], [], []>} : vector<32x32xf32>, vector<32x256xf32>, vector<32x256xf32> -> vector<32x256xf32>
    %37 = vector.extract_strided_slice %6 {offsets = [0, 6], sizes = [32, 1], strides = [1, 1]} : vector<32x11xf32> to vector<32x1xf32>
    %38 = vector.broadcast %37 : vector<32x1xf32> to vector<32x256xf32>
    %39 = arith.addf %36, %38 : vector<32x256xf32>
    %cst_18 = arith.constant dense<0.000000e+00> : vector<64x256xf32>
    %40 = tpu.matmul %3, %39, %cst_18 {dimension_numbers = #tpu.dot_dimension_numbers<[1], [0], [0], [1], [0, 0, 1, 1], [], []>} : vector<64x32xf32>, vector<32x256xf32>, vector<64x256xf32> -> vector<64x256xf32>
    %41 = vector.shape_cast %40 : vector<64x256xf32> to vector<8x8x256xf32>
    %cst_19 = arith.constant dense<0xFF800000> : vector<8x256xf32>
    %42 = vector.multi_reduction <maximumf>, %41, %cst_19 [1] : vector<8x8x256xf32> to vector<8x256xf32>
    %43 = vector.shape_cast %42 : vector<8x256xf32> to vector<8x1x256xf32>
    %44 = vector.broadcast %43 : vector<8x1x256xf32> to vector<8x8x256xf32>
    %45 = arith.subf %41, %44 : vector<8x8x256xf32>
    %46 = math.exp %45 : vector<8x8x256xf32>
    %cst_20 = arith.constant dense<0.000000e+00> : vector<8x256xf32>
    %47 = vector.multi_reduction <add>, %46, %cst_20 [1] : vector<8x8x256xf32> to vector<8x256xf32>
    %48 = vector.shape_cast %47 : vector<8x256xf32> to vector<8x1x256xf32>
    %cst_21 = arith.constant 1.000000e+00 : f32
    %49 = vector.broadcast %cst_21 : f32 to vector<8x1x256xf32>
    %50 = arith.divf %49, %48 : vector<8x1x256xf32>
    %51 = vector.broadcast %50 : vector<8x1x256xf32> to vector<8x8x256xf32>
    %52 = arith.mulf %46, %51 : vector<8x8x256xf32>
    %53 = vector.shape_cast %52 : vector<8x8x256xf32> to vector<64x256xf32>
    %cst_22 = arith.constant dense<0.000000e+00> : vector<32x256xf32>
    %54 = tpu.matmul %5, %53, %cst_22 {dimension_numbers = #tpu.dot_dimension_numbers<[1], [0], [0], [1], [0, 0, 1, 1], [], []>} : vector<32x64xf32>, vector<64x256xf32>, vector<32x256xf32> -> vector<32x256xf32>
    %55 = vector.extract_strided_slice %34 {offsets = [32, 0], sizes = [32, 32], strides = [1, 1]} : vector<64x32xf32> to vector<32x32xf32>
    %cst_23 = arith.constant dense<0.000000e+00> : vector<32x256xf32>
    %56 = tpu.matmul %55, %54, %cst_23 {dimension_numbers = #tpu.dot_dimension_numbers<[1], [0], [0], [1], [0, 0, 1, 1], [], []>} : vector<32x32xf32>, vector<32x256xf32>, vector<32x256xf32> -> vector<32x256xf32>
    %57 = vector.extract_strided_slice %6 {offsets = [0, 7], sizes = [32, 1], strides = [1, 1]} : vector<32x11xf32> to vector<32x1xf32>
    %58 = vector.broadcast %57 : vector<32x1xf32> to vector<32x256xf32>
    %59 = arith.addf %56, %58 : vector<32x256xf32>
    %60 = arith.addf %11, %59 : vector<32x256xf32>
    %61 = vector.extract_strided_slice %6 {offsets = [0, 8], sizes = [32, 1], strides = [1, 1]} : vector<32x11xf32> to vector<32x1xf32>
    %62 = vector.extract_strided_slice %6 {offsets = [0, 9], sizes = [32, 1], strides = [1, 1]} : vector<32x11xf32> to vector<32x1xf32>
    %cst_24 = arith.constant dense<0.000000e+00> : vector<256xf32>
    %63 = vector.multi_reduction <add>, %60, %cst_24 [0] : vector<32x256xf32> to vector<256xf32>
    %64 = vector.shape_cast %63 : vector<256xf32> to vector<1x256xf32>
    %cst_25 = arith.constant 3.200000e+01 : f32
    %65 = vector.broadcast %cst_25 : f32 to vector<1x256xf32>
    %66 = arith.divf %64, %65 : vector<1x256xf32>
    %67 = vector.broadcast %66 : vector<1x256xf32> to vector<32x256xf32>
    %68 = arith.subf %60, %67 : vector<32x256xf32>
    %69 = arith.mulf %68, %68 : vector<32x256xf32>
    %cst_26 = arith.constant dense<0.000000e+00> : vector<256xf32>
    %70 = vector.multi_reduction <add>, %69, %cst_26 [0] : vector<32x256xf32> to vector<256xf32>
    %71 = vector.shape_cast %70 : vector<256xf32> to vector<1x256xf32>
    %cst_27 = arith.constant 3.200000e+01 : f32
    %72 = vector.broadcast %cst_27 : f32 to vector<1x256xf32>
    %73 = arith.divf %71, %72 : vector<1x256xf32>
    %cst_28 = arith.constant 9.99999974E-6 : f32
    %74 = vector.broadcast %cst_28 : f32 to vector<1x256xf32>
    %75 = arith.addf %73, %74 : vector<1x256xf32>
    %76 = math.rsqrt %75 : vector<1x256xf32>
    %77 = vector.broadcast %76 : vector<1x256xf32> to vector<32x256xf32>
    %78 = arith.mulf %68, %77 : vector<32x256xf32>
    %79 = vector.broadcast %61 : vector<32x1xf32> to vector<32x256xf32>
    %80 = arith.mulf %78, %79 : vector<32x256xf32>
    %81 = vector.broadcast %62 : vector<32x1xf32> to vector<32x256xf32>
    %82 = arith.addf %80, %81 : vector<32x256xf32>
    %c0_29 = arith.constant 0 : index
    %c0_30 = arith.constant 0 : index
    %83 = vector.load %arg7[%c0_29, %c0_30] : memref<128x33xf32, #tpu.memory_space<vmem>>, vector<128x33xf32>
    %84 = vector.extract_strided_slice %83 {offsets = [0, 0], sizes = [128, 32], strides = [1, 1]} : vector<128x33xf32> to vector<128x32xf32>
    %cst_31 = arith.constant dense<0.000000e+00> : vector<128x256xf32>
    %85 = tpu.matmul %84, %82, %cst_31 {dimension_numbers = #tpu.dot_dimension_numbers<[1], [0], [0], [1], [0, 0, 1, 1], [], []>} : vector<128x32xf32>, vector<32x256xf32>, vector<128x256xf32> -> vector<128x256xf32>
    %86 = vector.extract_strided_slice %83 {offsets = [0, 32], sizes = [128, 1], strides = [1, 1]} : vector<128x33xf32> to vector<128x1xf32>
    %87 = vector.broadcast %86 : vector<128x1xf32> to vector<128x256xf32>
    %88 = arith.addf %85, %87 : vector<128x256xf32>
    %cst_32 = arith.constant 5.000000e-01 : f32
    %89 = vector.broadcast %cst_32 : f32 to vector<128x256xf32>
    %90 = arith.mulf %89, %88 : vector<128x256xf32>
    %cst_33 = arith.constant 0.707106769 : f32
    %91 = vector.broadcast %cst_33 : f32 to vector<128x256xf32>
    %92 = arith.mulf %88, %91 : vector<128x256xf32>
    %93 = math.erf %92 : vector<128x256xf32>
    %cst_34 = arith.constant 1.000000e+00 : f32
    %94 = vector.broadcast %cst_34 : f32 to vector<128x256xf32>
    %95 = arith.addf %94, %93 : vector<128x256xf32>
    %96 = arith.mulf %90, %95 : vector<128x256xf32>
    %c0_35 = arith.constant 0 : index
    %c0_36 = arith.constant 0 : index
    %97 = vector.load %arg8[%c0_35, %c0_36] : memref<32x128xf32, #tpu.memory_space<vmem>>, vector<32x128xf32>
    %cst_37 = arith.constant dense<0.000000e+00> : vector<32x256xf32>
    %98 = tpu.matmul %97, %96, %cst_37 {dimension_numbers = #tpu.dot_dimension_numbers<[1], [0], [0], [1], [0, 0, 1, 1], [], []>} : vector<32x128xf32>, vector<128x256xf32>, vector<32x256xf32> -> vector<32x256xf32>
    %99 = vector.extract_strided_slice %6 {offsets = [0, 10], sizes = [32, 1], strides = [1, 1]} : vector<32x11xf32> to vector<32x1xf32>
    %100 = vector.broadcast %99 : vector<32x1xf32> to vector<32x256xf32>
    %101 = arith.addf %98, %100 : vector<32x256xf32>
    %102 = arith.addf %60, %101 : vector<32x256xf32>
    %c0_38 = arith.constant 0 : index
    %c0_39 = arith.constant 0 : index
    %103 = vector.load %arg9[%c0_38, %c0_39] : memref<3x33xf32, #tpu.memory_space<vmem>>, vector<3x33xf32>
    %104 = vector.extract_strided_slice %103 {offsets = [0, 0], sizes = [3, 32], strides = [1, 1]} : vector<3x33xf32> to vector<3x32xf32>
    %cst_40 = arith.constant dense<0.000000e+00> : vector<3x256xf32>
    %105 = tpu.matmul %104, %102, %cst_40 {dimension_numbers = #tpu.dot_dimension_numbers<[1], [0], [0], [1], [0, 0, 1, 1], [], []>} : vector<3x32xf32>, vector<32x256xf32>, vector<3x256xf32> -> vector<3x256xf32>
    %106 = vector.extract_strided_slice %103 {offsets = [0, 32], sizes = [3, 1], strides = [1, 1]} : vector<3x33xf32> to vector<3x1xf32>
    %107 = vector.broadcast %106 : vector<3x1xf32> to vector<3x256xf32>
    %108 = arith.addf %105, %107 : vector<3x256xf32>
    %c0_41 = arith.constant 0 : index
    %c0_42 = arith.constant 0 : index
    %c0_43 = arith.constant 0 : index
    %109 = vector.load %arg10[%c0_41, %c0_42, %c0_43] : memref<1x3x256xf32, #tpu.memory_space<vmem>>, vector<1x3x256xf32>
    %110 = vector.shape_cast %109 : vector<1x3x256xf32> to vector<3x256xf32>
    %111 = vector.shape_cast %108 : vector<3x256xf32> to vector<1x3x256xf32>
    tpu.vector_store %arg10[%c0_41, %c0_42, %c0_43], %111 {strides = array<i32>} : memref<1x3x256xf32, #tpu.memory_space<vmem>>, vector<1x3x256xf32>,
    return
  }
  func.func @transform_0(%arg0: i32, %arg1: i32) -> (i32, i32, i32) {
    %c0_i32 = arith.constant 0 : i32
    %c0_i32_0 = arith.constant 0 : i32
    return %arg0, %c0_i32, %arg1 : i32, i32, i32
  }
  func.func @transform_1(%arg0: i32, %arg1: i32) -> (i32, i32, i32) {
    %c0_i32 = arith.constant 0 : i32
    %c0_i32_0 = arith.constant 0 : i32
    %c0_i32_1 = arith.constant 0 : i32
    return %arg0, %c0_i32, %c0_i32_0 : i32, i32, i32
  }
  func.func @transform_2(%arg0: i32, %arg1: i32) -> (i32, i32, i32) {
    %c0_i32 = arith.constant 0 : i32
    %c0_i32_0 = arith.constant 0 : i32
    %c0_i32_1 = arith.constant 0 : i32
    return %arg0, %c0_i32, %c0_i32_0 : i32, i32, i32
  }
  func.func @transform_3(%arg0: i32, %arg1: i32) -> (i32, i32) {
    %c0_i32 = arith.constant 0 : i32
    %c0_i32_0 = arith.constant 0 : i32
    %c0_i32_1 = arith.constant 0 : i32
    return %c0_i32, %c0_i32_0 : i32, i32
  }
  func.func @transform_4(%arg0: i32, %arg1: i32) -> (i32, i32) {
    %c0_i32 = arith.constant 0 : i32
    %c0_i32_0 = arith.constant 0 : i32
    %c0_i32_1 = arith.constant 0 : i32
    return %c0_i32, %c0_i32_0 : i32, i32
  }
  func.func @transform_5(%arg0: i32, %arg1: i32) -> (i32, i32) {
    %c0_i32 = arith.constant 0 : i32
    %c0_i32_0 = arith.constant 0 : i32
    %c0_i32_1 = arith.constant 0 : i32
    return %c0_i32, %c0_i32_0 : i32, i32
  }
  func.func @transform_6(%arg0: i32, %arg1: i32) -> (i32, i32) {
    %c0_i32 = arith.constant 0 : i32
    %c0_i32_0 = arith.constant 0 : i32
    %c0_i32_1 = arith.constant 0 : i32
    return %c0_i32, %c0_i32_0 : i32, i32
  }
  func.func @transform_7(%arg0: i32, %arg1: i32) -> (i32, i32) {
    %c0_i32 = arith.constant 0 : i32
    %c0_i32_0 = arith.constant 0 : i32
    %c0_i32_1 = arith.constant 0 : i32
    return %c0_i32, %c0_i32_0 : i32, i32
  }
  func.func @transform_8(%arg0: i32, %arg1: i32) -> (i32, i32, i32) {
    %c0_i32 = arith.constant 0 : i32
    %c0_i32_0 = arith.constant 0 : i32
    return %arg0, %c0_i32, %arg1 : i32, i32, i32
  }
}

</mosaic_0001>

<llo_original>
// kernel: tpu_custom_call.1
$region0: #{tpu_custom_call.1}
  #allocation0 [shape = 'u32[]', space=smem, size = 0x4, offset = 0x4, fixed_abs, tag = 'smem constant byte address 0x4 - core index']
  #allocation1 [shape = 'u32[144,128]{1,0:T(1,128)}', space=vmem, size = 0x12000, scoped, tag = 'internal scratch']
  %s0 = inlined_call_operand.vmem [shape: f32[2,3,256], index: 0, kind: input, shape index: {}]
  %s1 = inlined_call_operand.vmem [shape: f32[2,64,32], index: 1, kind: input, shape index: {}]
  %s2 = inlined_call_operand.vmem [shape: f32[2,32,64], index: 2, kind: input, shape index: {}]
  %s3 = inlined_call_operand.vmem [shape: f32[32,11], index: 3, kind: input, shape index: {}]
  %s4 = inlined_call_operand.vmem [shape: f32[64,32], index: 4, kind: input, shape index: {}]
  %s5 = inlined_call_operand.vmem [shape: f32[128,33], index: 5, kind: input, shape index: {}]
  %s6 = inlined_call_operand.vmem [shape: f32[32,128], index: 6, kind: input, shape index: {}]
  %s7 = inlined_call_operand.vmem [shape: f32[3,33], index: 7, kind: input, shape index: {}]
  %s8 = inlined_call_operand.vmem [shape: f32[2,3,256], index: 8, kind: output, shape index: {}]
  %s9 = sld [smem:[#allocation0]]
  $region65: #{tpu_custom_call.1} parent=0
    _
  %s11 = ssub.s32 1, %s9
  %s12 = scalar_select 0, %s11, %s9
  loop: start=0, step=1, limit=4
  $region2: #{tpu_custom_call.1} parent=0 // loop_pre_header
    _
  $region3: #{tpu_custom_call.1} parent=0 // loop_header
    %s14 = sphi 0, %s18
    %p15 = scmp.ge.s32.totalorder %s14, 4
    %s21 = sphi 0, %s33
    %s22 = sphi 0, %s29
    %s23 = sphi 0, %s21
    %s24 = sphi 0, %s22
    %s25 = sphi 0, %s23
    %s26 = sphi 0, %s24
    %s38 = sphi 0, %s40
    %s41 = sphi 0, %s38
    %s42 = sphi 0, %s41
    %s58 = sphi 0, %s42
    %s64 = sphi 0, %s66
    %s67 = sphi 0, %s64
    %s68 = sphi 0, %s67
    %s84 = sphi 0, %s68
    %s90 = sphi 0, %s92
    %s93 = sphi 0, %s90
    %s94 = sphi 0, %s93
    %s110 = sphi 0, %s94
    %s114 = sphi 0, %s114
    %s116 = sphi 0, %s114
    %s117 = sphi 0, %s116
    %s131 = sphi 0, %s117
    %s135 = sphi 0, %s135
    %s137 = sphi 0, %s135
    %s138 = sphi 0, %s137
    %s152 = sphi 0, %s138
    %s156 = sphi 0, %s156
    %s158 = sphi 0, %s156
    %s159 = sphi 0, %s158
    %s173 = sphi 0, %s159
    %s177 = sphi 0, %s177
    %s179 = sphi 0, %s177
    %s180 = sphi 0, %s179
    %s194 = sphi 0, %s180
    %s198 = sphi 0, %s198
    %s200 = sphi 0, %s198
    %s201 = sphi 0, %s200
    %s215 = sphi 0, %s201
    %s223 = sphi 0, %s225
    %s226 = sphi 0, %s223
    %s227 = sphi 0, %s226
    %s243 = sphi 0, %s227
  $region4: #{tpu_custom_call.1} parent=0 // loop_header_branch
    %17 = sbr.rel (%p15) target = $region8
  $region5: #{tpu_custom_call.1} parent=0 // loop_body
    %s19 = ssub.s32 %s14, 1
    %s20 = ssub.s32 %s14, 2
    %s27 = sadd.s32 1, %s22
    %p28 = scmp.ge.s32.totalorder %s27, 1
    %s29 = scalar_select %p28, 0, %s27
    %s30 = sadd.s32 1, %s21
    %s31 = scalar_select %p28, %s30, %s21
    %p32 = scmp.ge.s32.totalorder %s31, 2
    %s33 = scalar_select %p32, 0, %s31
    %s34 = ssub.s32 %s21, %s33
    %s35 = ssub.s32 %s22, %s29
    %s36 = sor.u32 %s34, %s35
    %p37 = scmp.eq.s32.totalorder %s36, 0
    %s39 = sadd.s32 %s38, 1
    %s40 = scalar_select %p37, %s38, %s39
    %p43 = pneg %p37
    %p44 = scmp.eq.s32.totalorder %s14, 1
    %p45 = por %p43, %p44
    %p46 = scmp.ne.s32.totalorder %s38, %s41
    %p47 = scmp.eq.s32.totalorder %s14, 0
    %p48 = por %p46, %p47
    %p49 = scmp.ne.s32.totalorder %s38, %s41
    %p50 = scmp.eq.s32.totalorder %s19, 1
    %p51 = por %p49, %p50
    %p52 = scmp.ne.s32.totalorder %s41, %s42
    %p53 = scmp.eq.s32.totalorder %s19, 0
    %p54 = por %p52, %p53
    %p55 = scmp.ne.s32.totalorder %s41, %s42
    %p56 = scmp.eq.s32.totalorder %s20, 1
    %p57 = por %p55, %p56
    %p59 = scmp.ne.s32.totalorder %s42, %s58
    %p60 = scmp.eq.s32.totalorder %s20, 0
    %p61 = por %p59, %p60
    %s62 = ssub.s32 %s21, %s33
    %p63 = scmp.eq.s32.totalorder %s62, 0
    %s65 = sadd.s32 %s64, 1
    %s66 = scalar_select %p63, %s64, %s65
    %p69 = pneg %p63
    %p70 = scmp.eq.s32.totalorder %s14, 1
    %p71 = por %p69, %p70
    %p72 = scmp.ne.s32.totalorder %s64, %s67
    %p73 = scmp.eq.s32.totalorder %s14, 0
    %p74 = por %p72, %p73
    %p75 = scmp.ne.s32.totalorder %s64, %s67
    %p76 = scmp.eq.s32.totalorder %s19, 1
    %p77 = por %p75, %p76
    %p78 = scmp.ne.s32.totalorder %s67, %s68
    %p79 = scmp.eq.s32.totalorder %s19, 0
    %p80 = por %p78, %p79
    %p81 = scmp.ne.s32.totalorder %s67, %s68
    %p82 = scmp.eq.s32.totalorder %s20, 1
    %p83 = por %p81, %p82
    %p85 = scmp.ne.s32.totalorder %s68, %s84
    %p86 = scmp.eq.s32.totalorder %s20, 0
    %p87 = por %p85, %p86
    %s88 = ssub.s32 %s21, %s33
    %p89 = scmp.eq.s32.totalorder %s88, 0
    %s91 = sadd.s32 %s90, 1
    %s92 = scalar_select %p89, %s90, %s91
    %p95 = pneg %p89
    %p96 = scmp.eq.s32.totalorder %s14, 1
    %p97 = por %p95, %p96
    %p98 = scmp.ne.s32.totalorder %s90, %s93
    %p99 = scmp.eq.s32.totalorder %s14, 0
    %p100 = por %p98, %p99
    %p101 = scmp.ne.s32.totalorder %s90, %s93
    %p102 = scmp.eq.s32.totalorder %s19, 1
    %p103 = por %p101, %p102
    %p104 = scmp.ne.s32.totalorder %s93, %s94
    %p105 = scmp.eq.s32.totalorder %s19, 0
    %p106 = por %p104, %p105
    %p107 = scmp.ne.s32.totalorder %s93, %s94
    %p108 = scmp.eq.s32.totalorder %s20, 1
    %p109 = por %p107, %p108
    %p111 = scmp.ne.s32.totalorder %s94, %s110
    %p112 = scmp.eq.s32.totalorder %s20, 0
    %p113 = por %p111, %p112
    %s115 = sadd.s32 %s114, 1
    %p118 = scmp.eq.s32.totalorder %s14, 1
    %p119 = scmp.ne.s32.totalorder %s114, %s116
    %p120 = scmp.eq.s32.totalorder %s14, 0
    %p121 = por %p119, %p120
    %p122 = scmp.ne.s32.totalorder %s114, %s116
    %p123 = scmp.eq.s32.totalorder %s19, 1
    %p124 = por %p122, %p123
    %p125 = scmp.ne.s32.totalorder %s116, %s117
    %p126 = scmp.eq.s32.totalorder %s19, 0
    %p127 = por %p125, %p126
    %p128 = scmp.ne.s32.totalorder %s116, %s117
    %p129 = scmp.eq.s32.totalorder %s20, 1
    %p130 = por %p128, %p129
    %p132 = scmp.ne.s32.totalorder %s117, %s131
    %p133 = scmp.eq.s32.totalorder %s20, 0
    %p134 = por %p132, %p133
    %s136 = sadd.s32 %s135, 1
    %p139 = scmp.eq.s32.totalorder %s14, 1
    %p140 = scmp.ne.s32.totalorder %s135, %s137
    %p141 = scmp.eq.s32.totalorder %s14, 0
    %p142 = por %p140, %p141
    %p143 = scmp.ne.s32.totalorder %s135, %s137
    %p144 = scmp.eq.s32.totalorder %s19, 1
    %p145 = por %p143, %p144
    %p146 = scmp.ne.s32.totalorder %s137, %s138
    %p147 = scmp.eq.s32.totalorder %s19, 0
    %p148 = por %p146, %p147
    %p149 = scmp.ne.s32.totalorder %s137, %s138
    %p150 = scmp.eq.s32.totalorder %s20, 1
    %p151 = por %p149, %p150
    %p153 = scmp.ne.s32.totalorder %s138, %s152
    %p154 = scmp.eq.s32.totalorder %s20, 0
    %p155 = por %p153, %p154
    %s157 = sadd.s32 %s156, 1
    %p160 = scmp.eq.s32.totalorder %s14, 1
    %p161 = scmp.ne.s32.totalorder %s156, %s158
    %p162 = scmp.eq.s32.totalorder %s14, 0
    %p163 = por %p161, %p162
    %p164 = scmp.ne.s32.totalorder %s156, %s158
    %p165 = scmp.eq.s32.totalorder %s19, 1
    %p166 = por %p164, %p165
    %p167 = scmp.ne.s32.totalorder %s158, %s159
    %p168 = scmp.eq.s32.totalorder %s19, 0
    %p169 = por %p167, %p168
    %p170 = scmp.ne.s32.totalorder %s158, %s159
    %p171 = scmp.eq.s32.totalorder %s20, 1
    %p172 = por %p170, %p171
    %p174 = scmp.ne.s32.totalorder %s159, %s173
    %p175 = scmp.eq.s32.totalorder %s20, 0
    %p176 = por %p174, %p175
    %s178 = sadd.s32 %s177, 1
    %p181 = scmp.eq.s32.totalorder %s14, 1
    %p182 = scmp.ne.s32.totalorder %s177, %s179
    %p183 = scmp.eq.s32.totalorder %s14, 0
    %p184 = por %p182, %p183
    %p185 = scmp.ne.s32.totalorder %s177, %s179
    %p186 = scmp.eq.s32.totalorder %s19, 1
    %p187 = por %p185, %p186
    %p188 = scmp.ne.s32.totalorder %s179, %s180
    %p189 = scmp.eq.s32.totalorder %s19, 0
    %p190 = por %p188, %p189
    %p191 = scmp.ne.s32.totalorder %s179, %s180
    %p192 = scmp.eq.s32.totalorder %s20, 1
    %p193 = por %p191, %p192
    %p195 = scmp.ne.s32.totalorder %s180, %s194
    %p196 = scmp.eq.s32.totalorder %s20, 0
    %p197 = por %p195, %p196
    %s199 = sadd.s32 %s198, 1
    %p202 = scmp.eq.s32.totalorder %s14, 1
    %p203 = scmp.ne.s32.totalorder %s198, %s200
    %p204 = scmp.eq.s32.totalorder %s14, 0
    %p205 = por %p203, %p204
    %p206 = scmp.ne.s32.totalorder %s198, %s200
    %p207 = scmp.eq.s32.totalorder %s19, 1
    %p208 = por %p206, %p207
    %p209 = scmp.ne.s32.totalorder %s200, %s201
    %p210 = scmp.eq.s32.totalorder %s19, 0
    %p211 = por %p209, %p210
    %p212 = scmp.ne.s32.totalorder %s200, %s201
    %p213 = scmp.eq.s32.totalorder %s20, 1
    %p214 = por %p212, %p213
    %p216 = scmp.ne.s32.totalorder %s201, %s215
    %p217 = scmp.eq.s32.totalorder %s20, 0
    %p218 = por %p216, %p217
    %s219 = ssub.s32 %s21, %s33
    %s220 = ssub.s32 %s22, %s29
    %s221 = sor.u32 %s219, %s220
    %p222 = scmp.eq.s32.totalorder %s221, 0
    %s224 = sadd.s32 %s223, 1
    %s225 = scalar_select %p222, %s223, %s224
    %p228 = pneg %p222
    %p229 = scmp.eq.s32.totalorder %s14, 1
    %p230 = por %p228, %p229
    %p231 = scmp.ne.s32.totalorder %s223, %s226
    %p232 = scmp.eq.s32.totalorder %s14, 0
    %p233 = por %p231, %p232
    %p234 = scmp.ne.s32.totalorder %s223, %s226
    %p235 = scmp.eq.s32.totalorder %s19, 1
    %p236 = por %p234, %p235
    %p237 = scmp.ne.s32.totalorder %s226, %s227
    %p238 = scmp.eq.s32.totalorder %s19, 0
    %p239 = por %p237, %p238
    %p240 = scmp.ne.s32.totalorder %s226, %s227
    %p241 = scmp.eq.s32.totalorder %s20, 1
    %p242 = por %p240, %p241
    %p244 = scmp.ne.s32.totalorder %s227, %s243
    %p245 = scmp.eq.s32.totalorder %s20, 0
    %p246 = por %p244, %p245
    %p247 = scmp.le.s32.totalorder 1, %s14
    %p248 = scmp.lt.s32.totalorder %s14, 3
    %p249 = pnand %p247, %p248
    %p250 = pneg %p249
    // Predicated region
    $region9: #{tpu_custom_call.1} parent=5 // pred_check
      _
    $region10: #{tpu_custom_call.1} parent=5 // pred_check_branch
      %252 = sbr.rel (%p249) target = $region12
    $region11: #{tpu_custom_call.1} parent=5 // pred_region
      %s253 = ssub.s32 %s14, 1
      // Predicated region
      $region13: #{tpu_custom_call.1} parent=11 // pred_check
        %p254 = pneg %p127
      $region14: #{tpu_custom_call.1} parent=11 // pred_check_branch
        %256 = sbr.rel (%p254) target = $region16
      $region15: #{tpu_custom_call.1} parent=11 // pred_region
        _
      $region16: #{tpu_custom_call.1} parent=11 // pred_fallthru
        _
      // Predicated region
      $region17: #{tpu_custom_call.1} parent=11 // pred_check
        %p257 = pneg %p148
      $region18: #{tpu_custom_call.1} parent=11 // pred_check_branch
        %259 = sbr.rel (%p257) target = $region20
      $region19: #{tpu_custom_call.1} parent=11 // pred_region
        _
      $region20: #{tpu_custom_call.1} parent=11 // pred_fallthru
        _
      // Predicated region
      $region21: #{tpu_custom_call.1} parent=11 // pred_check
        %p260 = pneg %p169
      $region22: #{tpu_custom_call.1} parent=11 // pred_check_branch
        %262 = sbr.rel (%p260) target = $region24
      $region23: #{tpu_custom_call.1} parent=11 // pred_region
        _
      $region24: #{tpu_custom_call.1} parent=11 // pred_fallthru
        _
      // Predicated region
      $region25: #{tpu_custom_call.1} parent=11 // pred_check
        %p263 = pneg %p190
      $region26: #{tpu_custom_call.1} parent=11 // pred_check_branch
        %265 = sbr.rel (%p263) target = $region28
      $region27: #{tpu_custom_call.1} parent=11 // pred_region
        _
      $region28: #{tpu_custom_call.1} parent=11 // pred_fallthru
        _
      // Predicated region
      $region29: #{tpu_custom_call.1} parent=11 // pred_check
        %p266 = pneg %p211
      $region30: #{tpu_custom_call.1} parent=11 // pred_check_branch
        %268 = sbr.rel (%p266) target = $region32
      $region31: #{tpu_custom_call.1} parent=11 // pred_region
        _
      $region32: #{tpu_custom_call.1} parent=11 // pred_fallthru
        _
    $region12: #{tpu_custom_call.1} parent=5 // pred_fallthru
      _
    %p269 = scmp.lt.s32.totalorder %s14, 2
    // Predicated region
    $region33: #{tpu_custom_call.1} parent=5 // pred_check
      %p270 = pneg %p269
    $region34: #{tpu_custom_call.1} parent=5 // pred_check_branch
      %272 = sbr.rel (%p270) target = $region36
    $region35: #{tpu_custom_call.1} parent=5 // pred_region
      // Predicated region
      $region37: #{tpu_custom_call.1} parent=35 // pred_check
        %p273 = pneg %p48
      $region38: #{tpu_custom_call.1} parent=35 // pred_check_branch
        %275 = sbr.rel (%p273) target = $region40
      $region39: #{tpu_custom_call.1} parent=35 // pred_region
        %s276 = smul.u32 2, %s22
        %p277 = scmp.lt.s32.totalorder %s21, 1
        %s278 = scalar_select %p277, %s21, 1
        %p279 = scmp.lt.s32.totalorder %s276, 1
        %s280 = scalar_select %p279, %s276, 1
        %s281 = smul.addr %s278, 2
        %s282 = sadd.s32 %s280, %s281
        %s283 = smul.addr %s282, 4
        %s284 = scalar_lea.vmem %s0, %s283
        %s285 = smul.u32 2, %s22
      $region40: #{tpu_custom_call.1} parent=35 // pred_fallthru
        _
      // Predicated region
      $region41: #{tpu_custom_call.1} parent=35 // pred_check
        %p286 = pneg %p74
      $region42: #{tpu_custom_call.1} parent=35 // pred_check_branch
        %288 = sbr.rel (%p286) target = $region44
      $region43: #{tpu_custom_call.1} parent=35 // pred_region
        %p289 = scmp.lt.s32.totalorder %s21, 1
        %s290 = scalar_select %p289, %s21, 1
        %s291 = smul.addr %s290, 8
        %s292 = smul.addr %s291, 8
        %s293 = scalar_lea.vmem %s1, %s292
      $region44: #{tpu_custom_call.1} parent=35 // pred_fallthru
        _
      // Predicated region
      $region45: #{tpu_custom_call.1} parent=35 // pred_check
        %p294 = pneg %p100
      $region46: #{tpu_custom_call.1} parent=35 // pred_check_branch
        %296 = sbr.rel (%p294) target = $region48
      $region47: #{tpu_custom_call.1} parent=35 // pred_region
        %p297 = scmp.lt.s32.totalorder %s21, 1
        %s298 = scalar_select %p297, %s21, 1
        %s299 = smul.addr %s298, 4
        %s300 = smul.addr %s299, 8
        %s301 = scalar_lea.vmem %s2, %s300
      $region48: #{tpu_custom_call.1} parent=35 // pred_fallthru
        _
    $region36: #{tpu_custom_call.1} parent=5 // pred_fallthru
      _
    %p302 = scmp.le.s32.totalorder 1, %s14
    %p303 = scmp.lt.s32.totalorder %s14, 3
    %p304 = pnand %p302, %p303
    %p305 = pneg %p304
    // Predicated region
    $region49: #{tpu_custom_call.1} parent=5 // pred_check
      _
    $region50: #{tpu_custom_call.1} parent=5 // pred_check_branch
      %307 = sbr.rel (%p304) target = $region52
    $region51: #{tpu_custom_call.1} parent=5 // pred_region
      %s308 = ssub.s32 %s14, 1
      %s309 = smul.u32 2, %s24
      %p310 = scmp.lt.s32.totalorder %s23, 1
      %s311 = scalar_select %p310, %s23, 1
      %p312 = scmp.lt.s32.totalorder %s309, 1
      %s313 = scalar_select %p312, %s309, 1
      %s314 = smul.addr %s311, 2
      %s315 = sadd.s32 %s313, %s314
      %s316 = smul.addr %s315, 4
      %s317 = scalar_lea.vmem %s0, %s316
      %p318 = pneg %p54
      %p319 = pneg %p51
      %p320 = scmp.lt.s32.totalorder %s23, 1
      %s321 = scalar_select %p320, %s23, 1
      %s322 = smul.addr %s321, 8
      %s323 = smul.addr %s322, 8
      %s324 = scalar_lea.vmem %s1, %s323
      %p325 = pneg %p80
      %p326 = pneg %p77
      %p327 = scmp.lt.s32.totalorder %s23, 1
      %s328 = scalar_select %p327, %s23, 1
      %s329 = smul.addr %s328, 4
      %s330 = smul.addr %s329, 8
      %s331 = scalar_lea.vmem %s2, %s330
      %p332 = pneg %p106
      %p333 = pneg %p103
      %p334 = pneg %p127
      %p335 = pneg %p124
      %p336 = pneg %p148
      %p337 = pneg %p145
      %p338 = pneg %p169
      %p339 = pneg %p166
      %p340 = pneg %p190
      %p341 = pneg %p187
      %p342 = pneg %p211
      %p343 = pneg %p208
      %p344 = pneg %p239
      %p345 = pneg %p236
      %s346 = smul.u32 2, %s24
      %p347 = scmp.lt.s32.totalorder %s23, 1
      %s348 = scalar_select %p347, %s23, 1
      %p349 = scmp.lt.s32.totalorder %s346, 1
      %s350 = scalar_select %p349, %s346, 1
      %s351 = smul.addr %s348, 2
      %s352 = sadd.s32 %s350, %s351
      %s353 = smul.addr %s352, 4
      %s354 = scalar_lea.vmem %s8, %s353
      %s355 = smul.u32 2, %s24
      %p356 = scmp.lt.s32.totalorder %s23, 1
      %s357 = scalar_select %p356, %s23, 1
      %p358 = scmp.lt.s32.totalorder %s355, 1
      %s359 = scalar_select %p358, %s355, 1
      %s360 = smul.addr %s357, 2
      %s361 = sadd.s32 %s359, %s360
      %s362 = smul.addr %s361, 4
      %s363 = scalar_lea.vmem %s0, %s362
      %s364 = smul.u32 2, %s24
      %p365 = scmp.lt.s32.totalorder %s23, 1
      %s366 = scalar_select %p365, %s23, 1
      %s367 = smul.addr %s366, 8
      %s368 = smul.addr %s367, 8
      %s369 = scalar_lea.vmem %s1, %s368
      %p370 = scmp.lt.s32.totalorder %s23, 1
      %s371 = scalar_select %p370, %s23, 1
      %s372 = smul.addr %s371, 4
      %s373 = smul.addr %s372, 8
      %s374 = scalar_lea.vmem %s2, %s373
      %s375 = smul.u32 2, %s24
      %p376 = scmp.lt.s32.totalorder %s23, 1
      %s377 = scalar_select %p376, %s23, 1
      %p378 = scmp.lt.s32.totalorder %s375, 1
      %s379 = scalar_select %p378, %s375, 1
      %s380 = smul.addr %s377, 2
      %s381 = sadd.s32 %s379, %s380
      %s382 = smul.addr %s381, 4
      %s383 = scalar_lea.vmem %s8, %s382
      %s384 = smul.u32 2, %s24
      %v385 = vld [vmem:[%s363] sm:$0x77]
      %v386 = vld [vmem:[%s369] sm:$0xff]
      %v387 = vld [vmem:[%s369 + $0x8] sm:$0xff]
      %v388 = vld [vmem:[%s369 + $0x10] sm:$0xff]
      %v389 = vld [vmem:[%s369 + $0x18] sm:$0xff]
      %v390 = vld [vmem:[%s369 + $0x20] sm:$0xff]
      %v391 = vld [vmem:[%s369 + $0x28] sm:$0xff]
      %v392 = vld [vmem:[%s369 + $0x30] sm:$0xff]
      %v393 = vld [vmem:[%s369 + $0x38] sm:$0xff]
      %v394 = vld [vmem:[%s374] sm:$0xff]
      %v395 = vld [vmem:[%s374 + $0x8] sm:$0xff]
      %v396 = vld [vmem:[%s374 + $0x10] sm:$0xff]
      %v397 = vld [vmem:[%s374 + $0x18] sm:$0xff]
      %v398 = vld [vmem:[%s3] sm:$0xff]
      %v399 = vld [vmem:[%s3 + $0x8] sm:$0xff]
      %v400 = vld [vmem:[%s3 + $0x10] sm:$0xff]
      %v401 = vld [vmem:[%s3 + $0x18] sm:$0xff]
      %403 = vset.pattern.permute.xlu0 3
      %404 = vperm.xlu0 %403, %v398
      %v405 = vpop.permute.xlu0 %404
      %408 = vset.pattern.permute.xlu0 3
      %409 = vperm.xlu0 %408, %v399
      %v410 = vpop.permute.xlu0 %409
      %413 = vset.pattern.permute.xlu0 3
      %414 = vperm.xlu0 %413, %v400
      %v415 = vpop.permute.xlu0 %414
      %418 = vset.pattern.permute.xlu0 3
      %419 = vperm.xlu0 %418, %v401
      %v420 = vpop.permute.xlu0 %419
      %v423 = vcombine.high %v385, %v385
      %vm424 = vcmask 23552
      %v425 = vsel %vm424, %v398, 0
      %v427 = vsel %vm424, %v399, 0
      %v429 = vsel %vm424, %v400, 0
      %v431 = vsel %vm424, %v401, 0
      %vm433 = vcmask 1042432
      %v434 = vsel %vm433, %v385, 0
      %v436 = vsel %vm433, %v423, 0
      %438 = vmatprep.subr.mxu0 %v436
      %439 = vmatpush1.msra.mxu0 %v434
      %440 = vmatprep.subr.mxu0 0.0
      %441 = vmatpush1.msra.mxu0 0.0
      %442 = vmatprep.subr.mxu0 0.0
      %443 = vmatpush1.msra.mxu0 0.0
      %444 = vmatprep.subr.mxu0 0.0
      %445 = vmatpush1.msra.mxu0 0.0
      %446 = vmatprep.subr.mxu0 0.0
      %447 = vmatpush1.msra.mxu0 0.0
      %448 = vmatprep.subr.mxu0 0.0
      %449 = vmatpush1.msra.mxu0 0.0
      %450 = vmatprep.subr.mxu0 0.0
      %451 = vmatpush1.msra.mxu0 0.0
      %452 = vmatprep.subr.mxu0 0.0
      %453 = vmatpush1.msra.mxu0 0.0
      %454 = vmatprep.subr.mxu0 0.0
      %455 = vmatpush1.msra.mxu0 0.0
      %456 = vmatprep.subr.mxu0 0.0
      %457 = vmatpush1.msra.mxu0 0.0
      %458 = vmatprep.subr.mxu0 0.0
      %459 = vmatpush1.msra.mxu0 0.0
      %460 = vmatprep.subr.mxu0 0.0
      %461 = vmatpush1.msra.mxu0 0.0
      %462 = vmatprep.subr.mxu0 0.0
      %463 = vmatpush1.msra.mxu0 0.0
      %464 = vmatprep.subr.mxu0 0.0
      %465 = vmatpush1.msra.mxu0 0.0
      %466 = vmatprep.subr.mxu0 0.0
      %467 = vmatpush1.msra.mxu0 0.0
      %468 = vmatprep.subr.mxu0 0.0
      %469 = vmatpush1.msra.mxu0 0.0
      %470 = vmatprep.subr.mxu0 0.0
      %471 = vmatpush1.msra.mxu0 0.0
      %472 = vmatprep.subr.mxu0 0.0
      %473 = vmatpush1.msra.mxu0 0.0
      %474 = vmatprep.subr.mxu0 0.0
      %475 = vmatpush1.msra.mxu0 0.0
      %476 = vmatprep.subr.mxu0 0.0
      %477 = vmatpush1.msra.mxu0 0.0
      %478 = vmatprep.subr.mxu0 0.0
      %479 = vmatpush1.msra.mxu0 0.0
      %480 = vmatprep.subr.mxu0 0.0
      %481 = vmatpush1.msra.mxu0 0.0
      %482 = vmatprep.subr.mxu0 0.0
      %483 = vmatpush1.msra.mxu0 0.0
      %484 = vmatprep.subr.mxu0 0.0
      %485 = vmatpush1.msra.mxu0 0.0
      %486 = vmatprep.subr.mxu0 0.0
      %487 = vmatpush1.msra.mxu0 0.0
      %488 = vmatprep.subr.mxu0 0.0
      %489 = vmatpush1.msra.mxu0 0.0
      %490 = vmatprep.subr.mxu0 0.0
      %491 = vmatpush1.msra.mxu0 0.0
      %492 = vmatprep.subr.mxu0 0.0
      %493 = vmatpush1.msra.mxu0 0.0
      %494 = vmatprep.subr.mxu0 0.0
      %495 = vmatpush1.msra.mxu0 0.0
      %496 = vmatprep.subr.mxu0 0.0
      %497 = vmatpush1.msra.mxu0 0.0
      %498 = vmatprep.subr.mxu0 0.0
      %499 = vmatpush1.msra.mxu0 0.0
      %500 = vmatprep.subr.mxu0 0.0
      %501 = vmatpush1.msra.mxu0 0.0
      %502 = vmatprep.mubr.f32.mxu0 0.0
      %503 = vmatmul.mubr.f32.gmra.mrb[0].mxu0 %v425
      %v504 = vpop.f32.mrb[0].mxu0
      %v505 = vadd.f32 %v405, %v504
      %v506 = vpop.f32.mrb[0].mxu0
      %v507 = vadd.f32 %v405, %v506
      %508 = vmatprep.mubr.f32.mxu0 0.0
      %509 = vmatmul.mubr.f32.gmra.mrb[0].mxu0 %v427
      %v510 = vpop.f32.mrb[0].mxu0
      %v511 = vadd.f32 %v410, %v510
      %v512 = vpop.f32.mrb[0].mxu0
      %v513 = vadd.f32 %v410, %v512
      %514 = vmatprep.mubr.f32.mxu0 0.0
      %515 = vmatmul.mubr.f32.gmra.mrb[0].mxu0 %v429
      %v516 = vpop.f32.mrb[0].mxu0
      %v517 = vadd.f32 %v415, %v516
      %v518 = vpop.f32.mrb[0].mxu0
      %v519 = vadd.f32 %v415, %v518
      %520 = vmatprep.mubr.f32.mxu0 0.0
      %521 = vmatmul.mubr.f32.gmra.mrb[0].mxu0 %v431
      %v522 = vpop.f32.mrb[0].mxu0
      %v523 = vadd.f32 %v420, %v522
      %v524 = vpop.f32.mrb[0].mxu0
      %v525 = vadd.f32 %v420, %v524
      %526 = vdwg.mxu0
      %v527 = vadd.f32 %v505, %v511
      %v528 = vadd.f32 %v527, %v517
      %v529 = vadd.f32 %v528, %v523
      %v530 = vrot.slane %v529, 4
      %v531 = vadd.f32 %v529, %v530
      %v532 = vrot.slane %v531, 2
      %v533 = vadd.f32 %v531, %v532
      %v534 = vrot.slane %v533, 1
      %v535 = vadd.f32 %v533, %v534
      %v536 = vadd.f32 %v507, %v513
      %v537 = vadd.f32 %v536, %v519
      %v538 = vadd.f32 %v537, %v525
      %v539 = vrot.slane %v538, 4
      %v540 = vadd.f32 %v538, %v539
      %v541 = vrot.slane %v540, 2
      %v542 = vadd.f32 %v540, %v541
      %v543 = vrot.slane %v542, 1
      %v544 = vadd.f32 %v542, %v543
      %v545 = vrcp.pop 32.0
      %v546 = vmul.f32 %v535, %v545
      %v547 = vmul.f32 %v544, %v545
      %v548 = vsub.f32 %v505, %v546
      %v549 = vsub.f32 %v507, %v547
      %v550 = vsub.f32 %v511, %v546
      %v551 = vsub.f32 %v513, %v547
      %v552 = vsub.f32 %v517, %v546
      %v553 = vsub.f32 %v519, %v547
      %v554 = vsub.f32 %v523, %v546
      %v555 = vsub.f32 %v525, %v547
      %v556 = vmul.f32 %v548, %v548
      %v557 = vmul.f32 %v549, %v549
      %v558 = vmul.f32 %v550, %v550
      %v559 = vmul.f32 %v551, %v551
      %v560 = vmul.f32 %v552, %v552
      %v561 = vmul.f32 %v553, %v553
      %v562 = vmul.f32 %v554, %v554
      %v563 = vmul.f32 %v555, %v555
      %v564 = vadd.f32 %v556, %v558
      %v565 = vadd.f32 %v564, %v560
      %v566 = vadd.f32 %v565, %v562
      %v567 = vrot.slane %v566, 4
      %v568 = vadd.f32 %v566, %v567
      %v569 = vrot.slane %v568, 2
      %v570 = vadd.f32 %v568, %v569
      %v571 = vrot.slane %v570, 1
      %v572 = vadd.f32 %v570, %v571
      %v573 = vadd.f32 %v557, %v559
      %v574 = vadd.f32 %v573, %v561
      %v575 = vadd.f32 %v574, %v563
      %v576 = vrot.slane %v575, 4
      %v577 = vadd.f32 %v575, %v576
      %v578 = vrot.slane %v577, 2
      %v579 = vadd.f32 %v577, %v578
      %v580 = vrot.slane %v579, 1
      %v581 = vadd.f32 %v579, %v580
      %v582 = vmul.f32 %v572, %v545
      %v583 = vmul.f32 %v581, %v545
      %v584 = vadd.f32 %v582, 1e-05
      %v585 = vadd.f32 %v583, 1e-05
      %v586 = vrsqrt.pop %v584
      %v587 = vrsqrt.pop %v585
      %v588 = vmul.f32 %v548, %v586
      %v589 = vmul.f32 %v549, %v587
      %v590 = vmul.f32 %v550, %v586
      %v591 = vmul.f32 %v551, %v587
      %v592 = vmul.f32 %v552, %v586
      %v593 = vmul.f32 %v553, %v587
      %v594 = vmul.f32 %v554, %v586
      %v595 = vmul.f32 %v555, %v587
      %596 = vset.pattern.permute.xlu0 4
      %597 = vperm.xlu0 %596, %v398
      %v598 = vpop.permute.xlu0 %597
      %600 = vset.pattern.permute.xlu0 4
      %601 = vperm.xlu0 %600, %v399
      %v602 = vpop.permute.xlu0 %601
      %604 = vset.pattern.permute.xlu0 4
      %605 = vperm.xlu0 %604, %v400
      %v606 = vpop.permute.xlu0 %605
      %608 = vset.pattern.permute.xlu0 4
      %609 = vperm.xlu0 %608, %v401
      %v610 = vpop.permute.xlu0 %609
      %v612 = vmul.f32 %v588, %v598
      %v613 = vmul.f32 %v589, %v598
      %v614 = vmul.f32 %v590, %v602
      %v615 = vmul.f32 %v591, %v602
      %v616 = vmul.f32 %v592, %v606
      %v617 = vmul.f32 %v593, %v606
      %v618 = vmul.f32 %v594, %v610
      %v619 = vmul.f32 %v595, %v610
      %620 = vset.pattern.permute.xlu0 5
      %621 = vperm.xlu0 %620, %v398
      %v622 = vpop.permute.xlu0 %621
      %624 = vset.pattern.permute.xlu0 5
      %625 = vperm.xlu0 %624, %v399
      %v626 = vpop.permute.xlu0 %625
      %628 = vset.pattern.permute.xlu0 5
      %629 = vperm.xlu0 %628, %v400
      %v630 = vpop.permute.xlu0 %629
      %632 = vset.pattern.permute.xlu0 5
      %633 = vperm.xlu0 %632, %v401
      %v634 = vpop.permute.xlu0 %633
      %v636 = vadd.f32 %v612, %v622
      %v637 = vadd.f32 %v613, %v622
      %v638 = vadd.f32 %v614, %v626
      %v639 = vadd.f32 %v615, %v626
      %v640 = vadd.f32 %v616, %v630
      %v641 = vadd.f32 %v617, %v630
      %v642 = vadd.f32 %v618, %v634
      %v643 = vadd.f32 %v619, %v634
      %v644 = vld [vmem:[%s4] sm:$0xff]
      %v645 = vld [vmem:[%s4 + $0x8] sm:$0xff]
      %v646 = vld [vmem:[%s4 + $0x10] sm:$0xff]
      %v647 = vld [vmem:[%s4 + $0x18] sm:$0xff]
      %v648 = vld [vmem:[%s4 + $0x20] sm:$0xff]
      %v649 = vld [vmem:[%s4 + $0x28] sm:$0xff]
      %v650 = vld [vmem:[%s4 + $0x30] sm:$0xff]
      %v651 = vld [vmem:[%s4 + $0x38] sm:$0xff]
      %652 = vset.pattern.permute.xlu0 6
      %653 = vperm.xlu0 %652, %v398
      %v654 = vpop.permute.xlu0 %653
      %656 = vset.pattern.permute.xlu0 6
      %657 = vperm.xlu0 %656, %v399
      %v658 = vpop.permute.xlu0 %657
      %660 = vset.pattern.permute.xlu0 6
      %661 = vperm.xlu0 %660, %v400
      %v662 = vpop.permute.xlu0 %661
      %664 = vset.pattern.permute.xlu0 6
      %665 = vperm.xlu0 %664, %v401
      %v666 = vpop.permute.xlu0 %665
      %vm668 = vcmask 261120
      %v670 = vsel %vm668, %v644, 0
      %v673 = vsel %vm668, %v645, 0
      %v676 = vsel %vm668, %v646, 0
      %v679 = vsel %vm668, %v647, 0
      %681 = vmatprep.subr.mxu0 %v637
      %682 = vmatpush1.msra.mxu0 %v636
      %683 = vmatprep.subr.mxu0 %v639
      %684 = vmatpush1.msra.mxu0 %v638
      %685 = vmatprep.subr.mxu0 %v641
      %686 = vmatpush1.msra.mxu0 %v640
      %687 = vmatprep.subr.mxu0 %v643
      %688 = vmatpush1.msra.mxu0 %v642
      %689 = vmatprep.subr.mxu0 0.0
      %690 = vmatpush1.msra.mxu0 0.0
      %691 = vmatprep.subr.mxu0 0.0
      %692 = vmatpush1.msra.mxu0 0.0
      %693 = vmatprep.subr.mxu0 0.0
      %694 = vmatpush1.msra.mxu0 0.0
      %695 = vmatprep.subr.mxu0 0.0
      %696 = vmatpush1.msra.mxu0 0.0
      %697 = vmatprep.subr.mxu0 0.0
      %698 = vmatpush1.msra.mxu0 0.0
      %699 = vmatprep.subr.mxu0 0.0
      %700 = vmatpush1.msra.mxu0 0.0
      %701 = vmatprep.subr.mxu0 0.0
      %702 = vmatpush1.msra.mxu0 0.0
      %703 = vmatprep.subr.mxu0 0.0
      %704 = vmatpush1.msra.mxu0 0.0
      %705 = vmatprep.subr.mxu0 0.0
      %706 = vmatpush1.msra.mxu0 0.0
      %707 = vmatprep.subr.mxu0 0.0
      %708 = vmatpush1.msra.mxu0 0.0
      %709 = vmatprep.subr.mxu0 0.0
      %710 = vmatpush1.msra.mxu0 0.0
      %711 = vmatprep.subr.mxu0 0.0
      %712 = vmatpush1.msra.mxu0 0.0
      %713 = vmatprep.subr.mxu0 0.0
      %714 = vmatpush1.msra.mxu0 0.0
      %715 = vmatprep.subr.mxu0 0.0
      %716 = vmatpush1.msra.mxu0 0.0
      %717 = vmatprep.subr.mxu0 0.0
      %718 = vmatpush1.msra.mxu0 0.0
      %719 = vmatprep.subr.mxu0 0.0
      %720 = vmatpush1.msra.mxu0 0.0
      %721 = vmatprep.subr.mxu0 0.0
      %722 = vmatpush1.msra.mxu0 0.0
      %723 = vmatprep.subr.mxu0 0.0
      %724 = vmatpush1.msra.mxu0 0.0
      %725 = vmatprep.subr.mxu0 0.0
      %726 = vmatpush1.msra.mxu0 0.0
      %727 = vmatprep.subr.mxu0 0.0
      %728 = vmatpush1.msra.mxu0 0.0
      %729 = vmatprep.subr.mxu0 0.0
      %730 = vmatpush1.msra.mxu0 0.0
      %731 = vmatprep.subr.mxu0 0.0
      %732 = vmatpush1.msra.mxu0 0.0
      %733 = vmatprep.subr.mxu0 0.0
      %734 = vmatpush1.msra.mxu0 0.0
      %735 = vmatprep.subr.mxu0 0.0
      %736 = vmatpush1.msra.mxu0 0.0
      %737 = vmatprep.subr.mxu0 0.0
      %738 = vmatpush1.msra.mxu0 0.0
      %739 = vmatprep.subr.mxu0 0.0
      %740 = vmatpush1.msra.mxu0 0.0
      %741 = vmatprep.subr.mxu0 0.0
      %742 = vmatpush1.msra.mxu0 0.0
      %743 = vmatprep.subr.mxu0 0.0
      %744 = vmatpush1.msra.mxu0 0.0
      %745 = vmatprep.mubr.f32.mxu0 0.0
      %746 = vmatmul.mubr.f32.gmra.mrb[0].mxu0 %v670
      %v747 = vpop.f32.mrb[0].mxu0
      %v748 = vadd.f32 %v654, %v747
      %v749 = vpop.f32.mrb[0].mxu0
      %v750 = vadd.f32 %v654, %v749
      %751 = vmatprep.mubr.f32.mxu0 0.0
      %752 = vmatmul.mubr.f32.gmra.mrb[0].mxu0 %v673
      %v753 = vpop.f32.mrb[0].mxu0
      %v754 = vadd.f32 %v658, %v753
      %v755 = vpop.f32.mrb[0].mxu0
      %v756 = vadd.f32 %v658, %v755
      %757 = vmatprep.mubr.f32.mxu0 0.0
      %758 = vmatmul.mubr.f32.gmra.mrb[0].mxu0 %v676
      %v759 = vpop.f32.mrb[0].mxu0
      %v760 = vadd.f32 %v662, %v759
      %v761 = vpop.f32.mrb[0].mxu0
      %v762 = vadd.f32 %v662, %v761
      %763 = vmatprep.mubr.f32.mxu0 0.0
      %764 = vmatmul.mubr.f32.gmra.mrb[0].mxu0 %v679
      %v765 = vpop.f32.mrb[0].mxu0
      %v766 = vadd.f32 %v666, %v765
      %v767 = vpop.f32.mrb[0].mxu0
      %v768 = vadd.f32 %v666, %v767
      %769 = vdwg.mxu0
      %v771 = vsel %vm668, %v386, 0
      %v774 = vsel %vm668, %v387, 0
      %v777 = vsel %vm668, %v388, 0
      %v780 = vsel %vm668, %v389, 0
      %v783 = vsel %vm668, %v390, 0
      %v786 = vsel %vm668, %v391, 0
      %v789 = vsel %vm668, %v392, 0
      %v792 = vsel %vm668, %v393, 0
      %794 = vmatprep.subr.mxu0 %v750
      %795 = vmatpush1.msra.mxu0 %v748
      %796 = vmatprep.subr.mxu0 %v756
      %797 = vmatpush1.msra.mxu0 %v754
      %798 = vmatprep.subr.mxu0 %v762
      %799 = vmatpush1.msra.mxu0 %v760
      %800 = vmatprep.subr.mxu0 %v768
      %801 = vmatpush1.msra.mxu0 %v766
      %802 = vmatprep.subr.mxu0 0.0
      %803 = vmatpush1.msra.mxu0 0.0
      %804 = vmatprep.subr.mxu0 0.0
      %805 = vmatpush1.msra.mxu0 0.0
      %806 = vmatprep.subr.mxu0 0.0
      %807 = vmatpush1.msra.mxu0 0.0
      %808 = vmatprep.subr.mxu0 0.0
      %809 = vmatpush1.msra.mxu0 0.0
      %810 = vmatprep.subr.mxu0 0.0
      %811 = vmatpush1.msra.mxu0 0.0
      %812 = vmatprep.subr.mxu0 0.0
      %813 = vmatpush1.msra.mxu0 0.0
      %814 = vmatprep.subr.mxu0 0.0
      %815 = vmatpush1.msra.mxu0 0.0
      %816 = vmatprep.subr.mxu0 0.0
      %817 = vmatpush1.msra.mxu0 0.0
      %818 = vmatprep.subr.mxu0 0.0
      %819 = vmatpush1.msra.mxu0 0.0
      %820 = vmatprep.subr.mxu0 0.0
      %821 = vmatpush1.msra.mxu0 0.0
      %822 = vmatprep.subr.mxu0 0.0
      %823 = vmatpush1.msra.mxu0 0.0
      %824 = vmatprep.subr.mxu0 0.0
      %825 = vmatpush1.msra.mxu0 0.0
      %826 = vmatprep.subr.mxu0 0.0
      %827 = vmatpush1.msra.mxu0 0.0
      %828 = vmatprep.subr.mxu0 0.0
      %829 = vmatpush1.msra.mxu0 0.0
      %830 = vmatprep.subr.mxu0 0.0
      %831 = vmatpush1.msra.mxu0 0.0
      %832 = vmatprep.subr.mxu0 0.0
      %833 = vmatpush1.msra.mxu0 0.0
      %834 = vmatprep.subr.mxu0 0.0
      %835 = vmatpush1.msra.mxu0 0.0
      %836 = vmatprep.subr.mxu0 0.0
      %837 = vmatpush1.msra.mxu0 0.0
      %838 = vmatprep.subr.mxu0 0.0
      %839 = vmatpush1.msra.mxu0 0.0
      %840 = vmatprep.subr.mxu0 0.0
      %841 = vmatpush1.msra.mxu0 0.0
      %842 = vmatprep.subr.mxu0 0.0
      %843 = vmatpush1.msra.mxu0 0.0
      %844 = vmatprep.subr.mxu0 0.0
      %845 = vmatpush1.msra.mxu0 0.0
      %846 = vmatprep.subr.mxu0 0.0
      %847 = vmatpush1.msra.mxu0 0.0
      %848 = vmatprep.subr.mxu0 0.0
      %849 = vmatpush1.msra.mxu0 0.0
      %850 = vmatprep.subr.mxu0 0.0
      %851 = vmatpush1.msra.mxu0 0.0
      %852 = vmatprep.subr.mxu0 0.0
      %853 = vmatpush1.msra.mxu0 0.0
      %854 = vmatprep.subr.mxu0 0.0
      %855 = vmatpush1.msra.mxu0 0.0
      %856 = vmatprep.subr.mxu0 0.0
      %857 = vmatpush1.msra.mxu0 0.0
      %858 = vmatprep.mubr.f32.mxu0 0.0
      %859 = vmatmul.mubr.f32.gmra.mrb[0].mxu0 %v771
      %v860 = vpop.f32.mrb[0].mxu0
      %v861 = vadd.f32 0.0, %v860
      %v862 = vpop.f32.mrb[0].mxu0
      %v863 = vadd.f32 0.0, %v862
      %864 = vmatprep.mubr.f32.mxu0 0.0
      %865 = vmatmul.mubr.f32.gmra.mrb[0].mxu0 %v774
      %v866 = vpop.f32.mrb[0].mxu0
      %v867 = vadd.f32 0.0, %v866
      %v868 = vpop.f32.mrb[0].mxu0
      %v869 = vadd.f32 0.0, %v868
      %870 = vmatprep.mubr.f32.mxu0 0.0
      %871 = vmatmul.mubr.f32.gmra.mrb[0].mxu0 %v777
      %v872 = vpop.f32.mrb[0].mxu0
      %v873 = vadd.f32 0.0, %v872
      %v874 = vpop.f32.mrb[0].mxu0
      %v875 = vadd.f32 0.0, %v874
      %876 = vmatprep.mubr.f32.mxu0 0.0
      %877 = vmatmul.mubr.f32.gmra.mrb[0].mxu0 %v780
      %v878 = vpop.f32.mrb[0].mxu0
      %v879 = vadd.f32 0.0, %v878
      %v880 = vpop.f32.mrb[0].mxu0
      %v881 = vadd.f32 0.0, %v880
      %882 = vmatprep.mubr.f32.mxu0 0.0
      %883 = vmatmul.mubr.f32.gmra.mrb[0].mxu0 %v783
      %v884 = vpop.f32.mrb[0].mxu0
      %v885 = vadd.f32 0.0, %v884
      %v886 = vpop.f32.mrb[0].mxu0
      %v887 = vadd.f32 0.0, %v886
      %888 = vmatprep.mubr.f32.mxu0 0.0
      %889 = vmatmul.mubr.f32.gmra.mrb[0].mxu0 %v786
      %v890 = vpop.f32.mrb[0].mxu0
      %v891 = vadd.f32 0.0, %v890
      %v892 = vpop.f32.mrb[0].mxu0
      %v893 = vadd.f32 0.0, %v892
      %894 = vmatprep.mubr.f32.mxu0 0.0
      %895 = vmatmul.mubr.f32.gmra.mrb[0].mxu0 %v789
      %v896 = vpop.f32.mrb[0].mxu0
      %v897 = vadd.f32 0.0, %v896
      %v898 = vpop.f32.mrb[0].mxu0
      %v899 = vadd.f32 0.0, %v898
      %900 = vmatprep.mubr.f32.mxu0 0.0
      %901 = vmatmul.mubr.f32.gmra.mrb[0].mxu0 %v792
      %v902 = vpop.f32.mrb[0].mxu0
      %v903 = vadd.f32 0.0, %v902
      %v904 = vpop.f32.mrb[0].mxu0
      %v905 = vadd.f32 0.0, %v904
      %906 = vdwg.mxu0
      %v907 = vrot.slane %v861, 4
      %v908 = vmax.f32 %v861, %v907
      %v909 = vrot.slane %v908, 2
      %v910 = vmax.f32 %v908, %v909
      %v911 = vrot.slane %v910, 1
      %v912 = vmax.f32 %v910, %v911
      %v913 = vrot.slane %v863, 4
      %v914 = vmax.f32 %v863, %v913
      %v915 = vrot.slane %v914, 2
      %v916 = vmax.f32 %v914, %v915
      %v917 = vrot.slane %v916, 1
      %v918 = vmax.f32 %v916, %v917
      %v919 = vrot.slane %v867, 4
      %v920 = vmax.f32 %v867, %v919
      %v921 = vrot.slane %v920, 2
      %v922 = vmax.f32 %v920, %v921
      %v923 = vrot.slane %v922, 1
      %v924 = vmax.f32 %v922, %v923
      %v925 = vrot.slane %v869, 4
      %v926 = vmax.f32 %v869, %v925
      %v927 = vrot.slane %v926, 2
      %v928 = vmax.f32 %v926, %v927
      %v929 = vrot.slane %v928, 1
      %v930 = vmax.f32 %v928, %v929
      %v931 = vrot.slane %v873, 4
      %v932 = vmax.f32 %v873, %v931
      %v933 = vrot.slane %v932, 2
      %v934 = vmax.f32 %v932, %v933
      %v935 = vrot.slane %v934, 1
      %v936 = vmax.f32 %v934, %v935
      %v937 = vrot.slane %v875, 4
      %v938 = vmax.f32 %v875, %v937
      %v939 = vrot.slane %v938, 2
      %v940 = vmax.f32 %v938, %v939
      %v941 = vrot.slane %v940, 1
      %v942 = vmax.f32 %v940, %v941
      %v943 = vrot.slane %v879, 4
      %v944 = vmax.f32 %v879, %v943
      %v945 = vrot.slane %v944, 2
      %v946 = vmax.f32 %v944, %v945
      %v947 = vrot.slane %v946, 1
      %v948 = vmax.f32 %v946, %v947
      %v949 = vrot.slane %v881, 4
      %v950 = vmax.f32 %v881, %v949
      %v951 = vrot.slane %v950, 2
      %v952 = vmax.f32 %v950, %v951
      %v953 = vrot.slane %v952, 1
      %v954 = vmax.f32 %v952, %v953
      %v955 = vrot.slane %v885, 4
      %v956 = vmax.f32 %v885, %v955
      %v957 = vrot.slane %v956, 2
      %v958 = vmax.f32 %v956, %v957
      %v959 = vrot.slane %v958, 1
      %v960 = vmax.f32 %v958, %v959
      %v961 = vrot.slane %v887, 4
      %v962 = vmax.f32 %v887, %v961
      %v963 = vrot.slane %v962, 2
      %v964 = vmax.f32 %v962, %v963
      %v965 = vrot.slane %v964, 1
      %v966 = vmax.f32 %v964, %v965
      %v967 = vrot.slane %v891, 4
      %v968 = vmax.f32 %v891, %v967
      %v969 = vrot.slane %v968, 2
      %v970 = vmax.f32 %v968, %v969
      %v971 = vrot.slane %v970, 1
      %v972 = vmax.f32 %v970, %v971
      %v973 = vrot.slane %v893, 4
      %v974 = vmax.f32 %v893, %v973
      %v975 = vrot.slane %v974, 2
      %v976 = vmax.f32 %v974, %v975
      %v977 = vrot.slane %v976, 1
      %v978 = vmax.f32 %v976, %v977
      %v979 = vrot.slane %v897, 4
      %v980 = vmax.f32 %v897, %v979
      %v981 = vrot.slane %v980, 2
      %v982 = vmax.f32 %v980, %v981
      %v983 = vrot.slane %v982, 1
      %v984 = vmax.f32 %v982, %v983
      %v985 = vrot.slane %v899, 4
      %v986 = vmax.f32 %v899, %v985
      %v987 = vrot.slane %v986, 2
      %v988 = vmax.f32 %v986, %v987
      %v989 = vrot.slane %v988, 1
      %v990 = vmax.f32 %v988, %v989
      %v991 = vrot.slane %v903, 4
      %v992 = vmax.f32 %v903, %v991
      %v993 = vrot.slane %v992, 2
      %v994 = vmax.f32 %v992, %v993
      %v995 = vrot.slane %v994, 1
      %v996 = vmax.f32 %v994, %v995
      %v997 = vrot.slane %v905, 4
      %v998 = vmax.f32 %v905, %v997
      %v999 = vrot.slane %v998, 2
      %v1000 = vmax.f32 %v998, %v999
      %v1001 = vrot.slane %v1000, 1
      %v1002 = vmax.f32 %v1000, %v1001
      %v1003 = vsub.f32 %v861, %v912
      %v1004 = vsub.f32 %v863, %v918
      %v1005 = vsub.f32 %v867, %v924
      %v1006 = vsub.f32 %v869, %v930
      %v1007 = vsub.f32 %v873, %v936
      %v1008 = vsub.f32 %v875, %v942
      %v1009 = vsub.f32 %v879, %v948
      %v1010 = vsub.f32 %v881, %v954
      %v1011 = vsub.f32 %v885, %v960
      %v1012 = vsub.f32 %v887, %v966
      %v1013 = vsub.f32 %v891, %v972
      %v1014 = vsub.f32 %v893, %v978
      %v1015 = vsub.f32 %v897, %v984
      %v1016 = vsub.f32 %v899, %v990
      %v1017 = vsub.f32 %v903, %v996
      %v1018 = vsub.f32 %v905, %v1002
      %v1019 = vmul.f32 %v1003, 1.442695
      %v1020 = vpow.pop %v1019
      %v1021 = vmul.f32 %v1004, 1.442695
      %v1022 = vpow.pop %v1021
      %v1023 = vmul.f32 %v1005, 1.442695
      %v1024 = vpow.pop %v1023
      %v1025 = vmul.f32 %v1006, 1.442695
      %v1026 = vpow.pop %v1025
      %v1027 = vmul.f32 %v1007, 1.442695
      %v1028 = vpow.pop %v1027
      %v1029 = vmul.f32 %v1008, 1.442695
      %v1030 = vpow.pop %v1029
      %v1031 = vmul.f32 %v1009, 1.442695
      %v1032 = vpow.pop %v1031
      %v1033 = vmul.f32 %v1010, 1.442695
      %v1034 = vpow.pop %v1033
      %v1035 = vmul.f32 %v1011, 1.442695
      %v1036 = vpow.pop %v1035
      %v1037 = vmul.f32 %v1012, 1.442695
      %v1038 = vpow.pop %v1037
      %v1039 = vmul.f32 %v1013, 1.442695
      %v1040 = vpow.pop %v1039
      %v1041 = vmul.f32 %v1014, 1.442695
      %v1042 = vpow.pop %v1041
      %v1043 = vmul.f32 %v1015, 1.442695
      %v1044 = vpow.pop %v1043
      %v1045 = vmul.f32 %v1016, 1.442695
      %v1046 = vpow.pop %v1045
      %v1047 = vmul.f32 %v1017, 1.442695
      %v1048 = vpow.pop %v1047
      %v1049 = vmul.f32 %v1018, 1.442695
      %v1050 = vpow.pop %v1049
      %v1051 = vrot.slane %v1020, 4
      %v1052 = vadd.f32 %v1020, %v1051
      %v1053 = vrot.slane %v1052, 2
      %v1054 = vadd.f32 %v1052, %v1053
      %v1055 = vrot.slane %v1054, 1
      %v1056 = vadd.f32 %v1054, %v1055
      %v1057 = vrot.slane %v1022, 4
      %v1058 = vadd.f32 %v1022, %v1057
      %v1059 = vrot.slane %v1058, 2
      %v1060 = vadd.f32 %v1058, %v1059
      %v1061 = vrot.slane %v1060, 1
      %v1062 = vadd.f32 %v1060, %v1061
      %v1063 = vrot.slane %v1024, 4
      %v1064 = vadd.f32 %v1024, %v1063
      %v1065 = vrot.slane %v1064, 2
      %v1066 = vadd.f32 %v1064, %v1065
      %v1067 = vrot.slane %v1066, 1
      %v1068 = vadd.f32 %v1066, %v1067
      %v1069 = vrot.slane %v1026, 4
      %v1070 = vadd.f32 %v1026, %v1069
      %v1071 = vrot.slane %v1070, 2
      %v1072 = vadd.f32 %v1070, %v1071
      %v1073 = vrot.slane %v1072, 1
      %v1074 = vadd.f32 %v1072, %v1073
      %v1075 = vrot.slane %v1028, 4
      %v1076 = vadd.f32 %v1028, %v1075
      %v1077 = vrot.slane %v1076, 2
      %v1078 = vadd.f32 %v1076, %v1077
      %v1079 = vrot.slane %v1078, 1
      %v1080 = vadd.f32 %v1078, %v1079
      %v1081 = vrot.slane %v1030, 4
      %v1082 = vadd.f32 %v1030, %v1081
      %v1083 = vrot.slane %v1082, 2
      %v1084 = vadd.f32 %v1082, %v1083
      %v1085 = vrot.slane %v1084, 1
      %v1086 = vadd.f32 %v1084, %v1085
      %v1087 = vrot.slane %v1032, 4
      %v1088 = vadd.f32 %v1032, %v1087
      %v1089 = vrot.slane %v1088, 2
      %v1090 = vadd.f32 %v1088, %v1089
      %v1091 = vrot.slane %v1090, 1
      %v1092 = vadd.f32 %v1090, %v1091
      %v1093 = vrot.slane %v1034, 4
      %v1094 = vadd.f32 %v1034, %v1093
      %v1095 = vrot.slane %v1094, 2
      %v1096 = vadd.f32 %v1094, %v1095
      %v1097 = vrot.slane %v1096, 1
      %v1098 = vadd.f32 %v1096, %v1097
      %v1099 = vrot.slane %v1036, 4
      %v1100 = vadd.f32 %v1036, %v1099
      %v1101 = vrot.slane %v1100, 2
      %v1102 = vadd.f32 %v1100, %v1101
      %v1103 = vrot.slane %v1102, 1
      %v1104 = vadd.f32 %v1102, %v1103
      %v1105 = vrot.slane %v1038, 4
      %v1106 = vadd.f32 %v1038, %v1105
      %v1107 = vrot.slane %v1106, 2
      %v1108 = vadd.f32 %v1106, %v1107
      %v1109 = vrot.slane %v1108, 1
      %v1110 = vadd.f32 %v1108, %v1109
      %v1111 = vrot.slane %v1040, 4
      %v1112 = vadd.f32 %v1040, %v1111
      %v1113 = vrot.slane %v1112, 2
      %v1114 = vadd.f32 %v1112, %v1113
      %v1115 = vrot.slane %v1114, 1
      %v1116 = vadd.f32 %v1114, %v1115
      %v1117 = vrot.slane %v1042, 4
      %v1118 = vadd.f32 %v1042, %v1117
      %v1119 = vrot.slane %v1118, 2
      %v1120 = vadd.f32 %v1118, %v1119
      %v1121 = vrot.slane %v1120, 1
      %v1122 = vadd.f32 %v1120, %v1121
      %v1123 = vrot.slane %v1044, 4
      %v1124 = vadd.f32 %v1044, %v1123
      %v1125 = vrot.slane %v1124, 2
      %v1126 = vadd.f32 %v1124, %v1125
      %v1127 = vrot.slane %v1126, 1
      %v1128 = vadd.f32 %v1126, %v1127
      %v1129 = vrot.slane %v1046, 4
      %v1130 = vadd.f32 %v1046, %v1129
      %v1131 = vrot.slane %v1130, 2
      %v1132 = vadd.f32 %v1130, %v1131
      %v1133 = vrot.slane %v1132, 1
      %v1134 = vadd.f32 %v1132, %v1133
      %v1135 = vrot.slane %v1048, 4
      %v1136 = vadd.f32 %v1048, %v1135
      %v1137 = vrot.slane %v1136, 2
      %v1138 = vadd.f32 %v1136, %v1137
      %v1139 = vrot.slane %v1138, 1
      %v1140 = vadd.f32 %v1138, %v1139
      %v1141 = vrot.slane %v1050, 4
      %v1142 = vadd.f32 %v1050, %v1141
      %v1143 = vrot.slane %v1142, 2
      %v1144 = vadd.f32 %v1142, %v1143
      %v1145 = vrot.slane %v1144, 1
      %v1146 = vadd.f32 %v1144, %v1145
      %v1147 = vrcp.pop %v1056
      %v1148 = vmul.f32 1.0, %v1147
      %v1149 = vrcp.pop %v1062
      %v1150 = vmul.f32 1.0, %v1149
      %v1151 = vrcp.pop %v1068
      %v1152 = vmul.f32 1.0, %v1151
      %v1153 = vrcp.pop %v1074
      %v1154 = vmul.f32 1.0, %v1153
      %v1155 = vrcp.pop %v1080
      %v1156 = vmul.f32 1.0, %v1155
      %v1157 = vrcp.pop %v1086
      %v1158 = vmul.f32 1.0, %v1157
      %v1159 = vrcp.pop %v1092
      %v1160 = vmul.f32 1.0, %v1159
      %v1161 = vrcp.pop %v1098
      %v1162 = vmul.f32 1.0, %v1161
      %v1163 = vrcp.pop %v1104
      %v1164 = vmul.f32 1.0, %v1163
      %v1165 = vrcp.pop %v1110
      %v1166 = vmul.f32 1.0, %v1165
      %v1167 = vrcp.pop %v1116
      %v1168 = vmul.f32 1.0, %v1167
      %v1169 = vrcp.pop %v1122
      %v1170 = vmul.f32 1.0, %v1169
      %v1171 = vrcp.pop %v1128
      %v1172 = vmul.f32 1.0, %v1171
      %v1173 = vrcp.pop %v1134
      %v1174 = vmul.f32 1.0, %v1173
      %v1175 = vrcp.pop %v1140
      %v1176 = vmul.f32 1.0, %v1175
      %v1177 = vrcp.pop %v1146
      %v1178 = vmul.f32 1.0, %v1177
      %v1179 = vmul.f32 %v1020, %v1148
      %v1180 = vmul.f32 %v1022, %v1150
      %v1181 = vmul.f32 %v1024, %v1152
      %v1182 = vmul.f32 %v1026, %v1154
      %v1183 = vmul.f32 %v1028, %v1156
      %v1184 = vmul.f32 %v1030, %v1158
      %v1185 = vmul.f32 %v1032, %v1160
      %v1186 = vmul.f32 %v1034, %v1162
      %v1187 = vmul.f32 %v1036, %v1164
      %v1188 = vmul.f32 %v1038, %v1166
      %v1189 = vmul.f32 %v1040, %v1168
      %v1190 = vmul.f32 %v1042, %v1170
      %v1191 = vmul.f32 %v1044, %v1172
      %v1192 = vmul.f32 %v1046, %v1174
      %v1193 = vmul.f32 %v1048, %v1176
      %v1194 = vmul.f32 %v1050, %v1178
      %vm1195 = vcmask 523264
      %v1197 = vsel %vm1195, %v394, 0
      %v1200 = vsel %vm1195, %v395, 0
      %v1203 = vsel %vm1195, %v396, 0
      %v1206 = vsel %vm1195, %v397, 0
      %1208 = vmatprep.subr.mxu0 %v1180
      %1209 = vmatpush1.msra.mxu0 %v1179
      %1210 = vmatprep.subr.mxu0 %v1182
      %1211 = vmatpush1.msra.mxu0 %v1181
      %1212 = vmatprep.subr.mxu0 %v1184
      %1213 = vmatpush1.msra.mxu0 %v1183
      %1214 = vmatprep.subr.mxu0 %v1186
      %1215 = vmatpush1.msra.mxu0 %v1185
      %1216 = vmatprep.subr.mxu0 %v1188
      %1217 = vmatpush1.msra.mxu0 %v1187
      %1218 = vmatprep.subr.mxu0 %v1190
      %1219 = vmatpush1.msra.mxu0 %v1189
      %1220 = vmatprep.subr.mxu0 %v1192
      %1221 = vmatpush1.msra.mxu0 %v1191
      %1222 = vmatprep.subr.mxu0 %v1194
      %1223 = vmatpush1.msra.mxu0 %v1193
      %1224 = vmatprep.subr.mxu0 0.0
      %1225 = vmatpush1.msra.mxu0 0.0
      %1226 = vmatprep.subr.mxu0 0.0
      %1227 = vmatpush1.msra.mxu0 0.0
      %1228 = vmatprep.subr.mxu0 0.0
      %1229 = vmatpush1.msra.mxu0 0.0
      %1230 = vmatprep.subr.mxu0 0.0
      %1231 = vmatpush1.msra.mxu0 0.0
      %1232 = vmatprep.subr.mxu0 0.0
      %1233 = vmatpush1.msra.mxu0 0.0
      %1234 = vmatprep.subr.mxu0 0.0
      %1235 = vmatpush1.msra.mxu0 0.0
      %1236 = vmatprep.subr.mxu0 0.0
      %1237 = vmatpush1.msra.mxu0 0.0
      %1238 = vmatprep.subr.mxu0 0.0
      %1239 = vmatpush1.msra.mxu0 0.0
      %1240 = vmatprep.subr.mxu0 0.0
      %1241 = vmatpush1.msra.mxu0 0.0
      %1242 = vmatprep.subr.mxu0 0.0
      %1243 = vmatpush1.msra.mxu0 0.0
      %1244 = vmatprep.subr.mxu0 0.0
      %1245 = vmatpush1.msra.mxu0 0.0
      %1246 = vmatprep.subr.mxu0 0.0
      %1247 = vmatpush1.msra.mxu0 0.0
      %1248 = vmatprep.subr.mxu0 0.0
      %1249 = vmatpush1.msra.mxu0 0.0
      %1250 = vmatprep.subr.mxu0 0.0
      %1251 = vmatpush1.msra.mxu0 0.0
      %1252 = vmatprep.subr.mxu0 0.0
      %1253 = vmatpush1.msra.mxu0 0.0
      %1254 = vmatprep.subr.mxu0 0.0
      %1255 = vmatpush1.msra.mxu0 0.0
      %1256 = vmatprep.subr.mxu0 0.0
      %1257 = vmatpush1.msra.mxu0 0.0
      %1258 = vmatprep.subr.mxu0 0.0
      %1259 = vmatpush1.msra.mxu0 0.0
      %1260 = vmatprep.subr.mxu0 0.0
      %1261 = vmatpush1.msra.mxu0 0.0
      %1262 = vmatprep.subr.mxu0 0.0
      %1263 = vmatpush1.msra.mxu0 0.0
      %1264 = vmatprep.subr.mxu0 0.0
      %1265 = vmatpush1.msra.mxu0 0.0
      %1266 = vmatprep.subr.mxu0 0.0
      %1267 = vmatpush1.msra.mxu0 0.0
      %1268 = vmatprep.subr.mxu0 0.0
      %1269 = vmatpush1.msra.mxu0 0.0
      %1270 = vmatprep.subr.mxu0 0.0
      %1271 = vmatpush1.msra.mxu0 0.0
      %1272 = vmatprep.mubr.f32.mxu0 0.0
      %1273 = vmatmul.mubr.f32.gmra.mrb[0].mxu0 %v1197
      %v1274 = vpop.f32.mrb[0].mxu0
      %v1275 = vadd.f32 0.0, %v1274
      %v1276 = vpop.f32.mrb[0].mxu0
      %v1277 = vadd.f32 0.0, %v1276
      %1278 = vmatprep.mubr.f32.mxu0 0.0
      %1279 = vmatmul.mubr.f32.gmra.mrb[0].mxu0 %v1200
      %v1280 = vpop.f32.mrb[0].mxu0
      %v1281 = vadd.f32 0.0, %v1280
      %v1282 = vpop.f32.mrb[0].mxu0
      %v1283 = vadd.f32 0.0, %v1282
      %1284 = vmatprep.mubr.f32.mxu0 0.0
      %1285 = vmatmul.mubr.f32.gmra.mrb[0].mxu0 %v1203
      %v1286 = vpop.f32.mrb[0].mxu0
      %v1287 = vadd.f32 0.0, %v1286
      %v1288 = vpop.f32.mrb[0].mxu0
      %v1289 = vadd.f32 0.0, %v1288
      %1290 = vmatprep.mubr.f32.mxu0 0.0
      %1291 = vmatmul.mubr.f32.gmra.mrb[0].mxu0 %v1206
      %v1292 = vpop.f32.mrb[0].mxu0
      %v1293 = vadd.f32 0.0, %v1292
      %v1294 = vpop.f32.mrb[0].mxu0
      %v1295 = vadd.f32 0.0, %v1294
      %1296 = vdwg.mxu0
      %1297 = vset.pattern.permute.xlu0 7
      %1298 = vperm.xlu0 %1297, %v398
      %v1299 = vpop.permute.xlu0 %1298
      %1301 = vset.pattern.permute.xlu0 7
      %1302 = vperm.xlu0 %1301, %v399
      %v1303 = vpop.permute.xlu0 %1302
      %1305 = vset.pattern.permute.xlu0 7
      %1306 = vperm.xlu0 %1305, %v400
      %v1307 = vpop.permute.xlu0 %1306
      %1309 = vset.pattern.permute.xlu0 7
      %1310 = vperm.xlu0 %1309, %v401
      %v1311 = vpop.permute.xlu0 %1310
      %v1314 = vsel %vm668, %v648, 0
      %v1317 = vsel %vm668, %v649, 0
      %v1320 = vsel %vm668, %v650, 0
      %v1323 = vsel %vm668, %v651, 0
      %1325 = vmatprep.subr.mxu0 %v1277
      %1326 = vmatpush1.msra.mxu0 %v1275
      %1327 = vmatprep.subr.mxu0 %v1283
      %1328 = vmatpush1.msra.mxu0 %v1281
      %1329 = vmatprep.subr.mxu0 %v1289
      %1330 = vmatpush1.msra.mxu0 %v1287
      %1331 = vmatprep.subr.mxu0 %v1295
      %1332 = vmatpush1.msra.mxu0 %v1293
      %1333 = vmatprep.subr.mxu0 0.0
      %1334 = vmatpush1.msra.mxu0 0.0
      %1335 = vmatprep.subr.mxu0 0.0
      %1336 = vmatpush1.msra.mxu0 0.0
      %1337 = vmatprep.subr.mxu0 0.0
      %1338 = vmatpush1.msra.mxu0 0.0
      %1339 = vmatprep.subr.mxu0 0.0
      %1340 = vmatpush1.msra.mxu0 0.0
      %1341 = vmatprep.subr.mxu0 0.0
      %1342 = vmatpush1.msra.mxu0 0.0
      %1343 = vmatprep.subr.mxu0 0.0
      %1344 = vmatpush1.msra.mxu0 0.0
      %1345 = vmatprep.subr.mxu0 0.0
      %1346 = vmatpush1.msra.mxu0 0.0
      %1347 = vmatprep.subr.mxu0 0.0
      %1348 = vmatpush1.msra.mxu0 0.0
      %1349 = vmatprep.subr.mxu0 0.0
      %1350 = vmatpush1.msra.mxu0 0.0
      %1351 = vmatprep.subr.mxu0 0.0
      %1352 = vmatpush1.msra.mxu0 0.0
      %1353 = vmatprep.subr.mxu0 0.0
      %1354 = vmatpush1.msra.mxu0 0.0
      %1355 = vmatprep.subr.mxu0 0.0
      %1356 = vmatpush1.msra.mxu0 0.0
      %1357 = vmatprep.subr.mxu0 0.0
      %1358 = vmatpush1.msra.mxu0 0.0
      %1359 = vmatprep.subr.mxu0 0.0
      %1360 = vmatpush1.msra.mxu0 0.0
      %1361 = vmatprep.subr.mxu0 0.0
      %1362 = vmatpush1.msra.mxu0 0.0
      %1363 = vmatprep.subr.mxu0 0.0
      %1364 = vmatpush1.msra.mxu0 0.0
      %1365 = vmatprep.subr.mxu0 0.0
      %1366 = vmatpush1.msra.mxu0 0.0
      %1367 = vmatprep.subr.mxu0 0.0
      %1368 = vmatpush1.msra.mxu0 0.0
      %1369 = vmatprep.subr.mxu0 0.0
      %1370 = vmatpush1.msra.mxu0 0.0
      %1371 = vmatprep.subr.mxu0 0.0
      %1372 = vmatpush1.msra.mxu0 0.0
      %1373 = vmatprep.subr.mxu0 0.0
      %1374 = vmatpush1.msra.mxu0 0.0
      %1375 = vmatprep.subr.mxu0 0.0
      %1376 = vmatpush1.msra.mxu0 0.0
      %1377 = vmatprep.subr.mxu0 0.0
      %1378 = vmatpush1.msra.mxu0 0.0
      %1379 = vmatprep.subr.mxu0 0.0
      %1380 = vmatpush1.msra.mxu0 0.0
      %1381 = vmatprep.subr.mxu0 0.0
      %1382 = vmatpush1.msra.mxu0 0.0
      %1383 = vmatprep.subr.mxu0 0.0
      %1384 = vmatpush1.msra.mxu0 0.0
      %1385 = vmatprep.subr.mxu0 0.0
      %1386 = vmatpush1.msra.mxu0 0.0
      %1387 = vmatprep.subr.mxu0 0.0
      %1388 = vmatpush1.msra.mxu0 0.0
      %1389 = vmatprep.mubr.f32.mxu0 0.0
      %1390 = vmatmul.mubr.f32.gmra.mrb[0].mxu0 %v1314
      %v1391 = vpop.f32.mrb[0].mxu0
      %v1392 = vadd.f32 %v1299, %v1391
      %v1393 = vpop.f32.mrb[0].mxu0
      %v1394 = vadd.f32 %v1299, %v1393
      %1395 = vmatprep.mubr.f32.mxu0 0.0
      %1396 = vmatmul.mubr.f32.gmra.mrb[0].mxu0 %v1317
      %v1397 = vpop.f32.mrb[0].mxu0
      %v1398 = vadd.f32 %v1303, %v1397
      %v1399 = vpop.f32.mrb[0].mxu0
      %v1400 = vadd.f32 %v1303, %v1399
      %1401 = vmatprep.mubr.f32.mxu0 0.0
      %1402 = vmatmul.mubr.f32.gmra.mrb[0].mxu0 %v1320
      %v1403 = vpop.f32.mrb[0].mxu0
      %v1404 = vadd.f32 %v1307, %v1403
      %v1405 = vpop.f32.mrb[0].mxu0
      %v1406 = vadd.f32 %v1307, %v1405
      %1407 = vmatprep.mubr.f32.mxu0 0.0
      %1408 = vmatmul.mubr.f32.gmra.mrb[0].mxu0 %v1323
      %v1409 = vpop.f32.mrb[0].mxu0
      %v1410 = vadd.f32 %v1311, %v1409
      %v1411 = vpop.f32.mrb[0].mxu0
      %v1412 = vadd.f32 %v1311, %v1411
      %1413 = vdwg.mxu0
      %v1414 = vadd.f32 %v505, %v1392
      %v1415 = vadd.f32 %v507, %v1394
      %v1416 = vadd.f32 %v511, %v1398
      %v1417 = vadd.f32 %v513, %v1400
      %v1418 = vadd.f32 %v517, %v1404
      %v1419 = vadd.f32 %v519, %v1406
      %v1420 = vadd.f32 %v523, %v1410
      %v1421 = vadd.f32 %v525, %v1412
      %v1422 = vadd.f32 %v1414, %v1416
      %v1423 = vadd.f32 %v1422, %v1418
      %v1424 = vadd.f32 %v1423, %v1420
      %v1425 = vrot.slane %v1424, 4
      %v1426 = vadd.f32 %v1424, %v1425
      %v1427 = vrot.slane %v1426, 2
      %v1428 = vadd.f32 %v1426, %v1427
      %v1429 = vrot.slane %v1428, 1
      %v1430 = vadd.f32 %v1428, %v1429
      %v1431 = vadd.f32 %v1415, %v1417
      %v1432 = vadd.f32 %v1431, %v1419
      %v1433 = vadd.f32 %v1432, %v1421
      %v1434 = vrot.slane %v1433, 4
      %v1435 = vadd.f32 %v1433, %v1434
      %v1436 = vrot.slane %v1435, 2
      %v1437 = vadd.f32 %v1435, %v1436
      %v1438 = vrot.slane %v1437, 1
      %v1439 = vadd.f32 %v1437, %v1438
      %v1440 = vmul.f32 %v1430, %v545
      %v1441 = vmul.f32 %v1439, %v545
      %v1442 = vsub.f32 %v1414, %v1440
      %v1443 = vsub.f32 %v1415, %v1441
      %v1444 = vsub.f32 %v1416, %v1440
      %v1445 = vsub.f32 %v1417, %v1441
      %v1446 = vsub.f32 %v1418, %v1440
      %v1447 = vsub.f32 %v1419, %v1441
      %v1448 = vsub.f32 %v1420, %v1440
      %v1449 = vsub.f32 %v1421, %v1441
      %v1450 = vmul.f32 %v1442, %v1442
      %v1451 = vmul.f32 %v1443, %v1443
      %v1452 = vmul.f32 %v1444, %v1444
      %v1453 = vmul.f32 %v1445, %v1445
      %v1454 = vmul.f32 %v1446, %v1446
      %v1455 = vmul.f32 %v1447, %v1447
      %v1456 = vmul.f32 %v1448, %v1448
      %v1457 = vmul.f32 %v1449, %v1449
      %v1458 = vadd.f32 %v1450, %v1452
      %v1459 = vadd.f32 %v1458, %v1454
      %v1460 = vadd.f32 %v1459, %v1456
      %v1461 = vrot.slane %v1460, 4
      %v1462 = vadd.f32 %v1460, %v1461
      %v1463 = vrot.slane %v1462, 2
      %v1464 = vadd.f32 %v1462, %v1463
      %v1465 = vrot.slane %v1464, 1
      %v1466 = vadd.f32 %v1464, %v1465
      %v1467 = vadd.f32 %v1451, %v1453
      %v1468 = vadd.f32 %v1467, %v1455
      %v1469 = vadd.f32 %v1468, %v1457
      %v1470 = vrot.slane %v1469, 4
      %v1471 = vadd.f32 %v1469, %v1470
      %v1472 = vrot.slane %v1471, 2
      %v1473 = vadd.f32 %v1471, %v1472
      %v1474 = vrot.slane %v1473, 1
      %v1475 = vadd.f32 %v1473, %v1474
      %v1476 = vmul.f32 %v1466, %v545
      %v1477 = vmul.f32 %v1475, %v545
      %v1478 = vadd.f32 %v1476, 1e-05
      %v1479 = vadd.f32 %v1477, 1e-05
      %v1480 = vrsqrt.pop %v1478
      %v1481 = vrsqrt.pop %v1479
      %v1482 = vmul.f32 %v1442, %v1480
      %v1483 = vmul.f32 %v1443, %v1481
      %v1484 = vmul.f32 %v1444, %v1480
      %v1485 = vmul.f32 %v1445, %v1481
      %v1486 = vmul.f32 %v1446, %v1480
      %v1487 = vmul.f32 %v1447, %v1481
      %v1488 = vmul.f32 %v1448, %v1480
      %v1489 = vmul.f32 %v1449, %v1481
      %1490 = vset.pattern.permute.xlu0 8
      %1491 = vperm.xlu0 %1490, %v398
      %v1492 = vpop.permute.xlu0 %1491
      %1494 = vset.pattern.permute.xlu0 8
      %1495 = vperm.xlu0 %1494, %v399
      %v1496 = vpop.permute.xlu0 %1495
      %1498 = vset.pattern.permute.xlu0 8
      %1499 = vperm.xlu0 %1498, %v400
      %v1500 = vpop.permute.xlu0 %1499
      %1502 = vset.pattern.permute.xlu0 8
      %1503 = vperm.xlu0 %1502, %v401
      %v1504 = vpop.permute.xlu0 %1503
      %v1506 = vmul.f32 %v1482, %v1492
      %v1507 = vmul.f32 %v1483, %v1492
      %v1508 = vmul.f32 %v1484, %v1496
      %v1509 = vmul.f32 %v1485, %v1496
      %v1510 = vmul.f32 %v1486, %v1500
      %v1511 = vmul.f32 %v1487, %v1500
      %v1512 = vmul.f32 %v1488, %v1504
      %v1513 = vmul.f32 %v1489, %v1504
      %1514 = vset.pattern.permute.xlu0 9
      %1515 = vperm.xlu0 %1514, %v398
      %v1516 = vpop.permute.xlu0 %1515
      %1518 = vset.pattern.permute.xlu0 9
      %1519 = vperm.xlu0 %1518, %v399
      %v1520 = vpop.permute.xlu0 %1519
      %1522 = vset.pattern.permute.xlu0 9
      %1523 = vperm.xlu0 %1522, %v400
      %v1524 = vpop.permute.xlu0 %1523
      %1526 = vset.pattern.permute.xlu0 9
      %1527 = vperm.xlu0 %1526, %v401
      %v1528 = vpop.permute.xlu0 %1527
      %v1530 = vadd.f32 %v1506, %v1516
      %v1531 = vadd.f32 %v1507, %v1516
      %v1532 = vadd.f32 %v1508, %v1520
      %v1533 = vadd.f32 %v1509, %v1520
      %v1534 = vadd.f32 %v1510, %v1524
      %v1535 = vadd.f32 %v1511, %v1524
      %v1536 = vadd.f32 %v1512, %v1528
      %v1537 = vadd.f32 %v1513, %v1528
      %v1538 = vld [vmem:[%s5] sm:$0xff]
      %v1539 = vld [vmem:[%s5 + $0x8] sm:$0xff]
      %v1540 = vld [vmem:[%s5 + $0x10] sm:$0xff]
      %v1541 = vld [vmem:[%s5 + $0x18] sm:$0xff]
      %v1542 = vld [vmem:[%s5 + $0x20] sm:$0xff]
      %v1543 = vld [vmem:[%s5 + $0x28] sm:$0xff]
      %v1544 = vld [vmem:[%s5 + $0x30] sm:$0xff]
      %v1545 = vld [vmem:[%s5 + $0x38] sm:$0xff]
      %v1546 = vld [vmem:[%s5 + $0x40] sm:$0xff]
      %v1547 = vld [vmem:[%s5 + $0x48] sm:$0xff]
      %v1548 = vld [vmem:[%s5 + $0x50] sm:$0xff]
      %v1549 = vld [vmem:[%s5 + $0x58] sm:$0xff]
      %v1550 = vld [vmem:[%s5 + $0x60] sm:$0xff]
      %v1551 = vld [vmem:[%s5 + $0x68] sm:$0xff]
      %v1552 = vld [vmem:[%s5 + $0x70] sm:$0xff]
      %v1553 = vld [vmem:[%s5 + $0x78] sm:$0xff]
      %1555 = vset.pattern.permute.xlu0 32
      %1556 = vperm.xlu0 %1555, %v1538
      %v1557 = vpop.permute.xlu0 %1556
      %1560 = vset.pattern.permute.xlu0 32
      %1561 = vperm.xlu0 %1560, %v1539
      %v1562 = vpop.permute.xlu0 %1561
      %1565 = vset.pattern.permute.xlu0 32
      %1566 = vperm.xlu0 %1565, %v1540
      %v1567 = vpop.permute.xlu0 %1566
      %1570 = vset.pattern.permute.xlu0 32
      %1571 = vperm.xlu0 %1570, %v1541
      %v1572 = vpop.permute.xlu0 %1571
      %1575 = vset.pattern.permute.xlu0 32
      %1576 = vperm.xlu0 %1575, %v1542
      %v1577 = vpop.permute.xlu0 %1576
      %1580 = vset.pattern.permute.xlu0 32
      %1581 = vperm.xlu0 %1580, %v1543
      %v1582 = vpop.permute.xlu0 %1581
      %1585 = vset.pattern.permute.xlu0 32
      %1586 = vperm.xlu0 %1585, %v1544
      %v1587 = vpop.permute.xlu0 %1586
      %1590 = vset.pattern.permute.xlu0 32
      %1591 = vperm.xlu0 %1590, %v1545
      %v1592 = vpop.permute.xlu0 %1591
      %1595 = vset.pattern.permute.xlu0 32
      %1596 = vperm.xlu0 %1595, %v1546
      %v1597 = vpop.permute.xlu0 %1596
      %1600 = vset.pattern.permute.xlu0 32
      %1601 = vperm.xlu0 %1600, %v1547
      %v1602 = vpop.permute.xlu0 %1601
      %1605 = vset.pattern.permute.xlu0 32
      %1606 = vperm.xlu0 %1605, %v1548
      %v1607 = vpop.permute.xlu0 %1606
      %1610 = vset.pattern.permute.xlu0 32
      %1611 = vperm.xlu0 %1610, %v1549
      %v1612 = vpop.permute.xlu0 %1611
      %1615 = vset.pattern.permute.xlu0 32
      %1616 = vperm.xlu0 %1615, %v1550
      %v1617 = vpop.permute.xlu0 %1616
      %1620 = vset.pattern.permute.xlu0 32
      %1621 = vperm.xlu0 %1620, %v1551
      %v1622 = vpop.permute.xlu0 %1621
      %1625 = vset.pattern.permute.xlu0 32
      %1626 = vperm.xlu0 %1625, %v1552
      %v1627 = vpop.permute.xlu0 %1626
      %1630 = vset.pattern.permute.xlu0 32
      %1631 = vperm.xlu0 %1630, %v1553
      %v1632 = vpop.permute.xlu0 %1631
      %v1634 = vsel %vm668, %v1538, 0
      %v1636 = vsel %vm668, %v1539, 0
      %v1638 = vsel %vm668, %v1540, 0
      %v1640 = vsel %vm668, %v1541, 0
      %v1642 = vsel %vm668, %v1542, 0
      %v1644 = vsel %vm668, %v1543, 0
      %v1646 = vsel %vm668, %v1544, 0
      %v1648 = vsel %vm668, %v1545, 0
      %v1650 = vsel %vm668, %v1546, 0
      %v1652 = vsel %vm668, %v1547, 0
      %v1654 = vsel %vm668, %v1548, 0
      %v1656 = vsel %vm668, %v1549, 0
      %v1658 = vsel %vm668, %v1550, 0
      %v1660 = vsel %vm668, %v1551, 0
      %v1662 = vsel %vm668, %v1552, 0
      %v1664 = vsel %vm668, %v1553, 0
      %1666 = vmatprep.subr.mxu0 %v1531
      %1667 = vmatpush1.msra.mxu0 %v1530
      %1668 = vmatprep.subr.mxu0 %v1533
      %1669 = vmatpush1.msra.mxu0 %v1532
      %1670 = vmatprep.subr.mxu0 %v1535
      %1671 = vmatpush1.msra.mxu0 %v1534
      %1672 = vmatprep.subr.mxu0 %v1537
      %1673 = vmatpush1.msra.mxu0 %v1536
      %1674 = vmatprep.subr.mxu0 0.0
      %1675 = vmatpush1.msra.mxu0 0.0
      %1676 = vmatprep.subr.mxu0 0.0
      %1677 = vmatpush1.msra.mxu0 0.0
      %1678 = vmatprep.subr.mxu0 0.0
      %1679 = vmatpush1.msra.mxu0 0.0
      %1680 = vmatprep.subr.mxu0 0.0
      %1681 = vmatpush1.msra.mxu0 0.0
      %1682 = vmatprep.subr.mxu0 0.0
      %1683 = vmatpush1.msra.mxu0 0.0
      %1684 = vmatprep.subr.mxu0 0.0
      %1685 = vmatpush1.msra.mxu0 0.0
      %1686 = vmatprep.subr.mxu0 0.0
      %1687 = vmatpush1.msra.mxu0 0.0
      %1688 = vmatprep.subr.mxu0 0.0
      %1689 = vmatpush1.msra.mxu0 0.0
      %1690 = vmatprep.subr.mxu0 0.0
      %1691 = vmatpush1.msra.mxu0 0.0
      %1692 = vmatprep.subr.mxu0 0.0
      %1693 = vmatpush1.msra.mxu0 0.0
      %1694 = vmatprep.subr.mxu0 0.0
      %1695 = vmatpush1.msra.mxu0 0.0
      %1696 = vmatprep.subr.mxu0 0.0
      %1697 = vmatpush1.msra.mxu0 0.0
      %1698 = vmatprep.subr.mxu0 0.0
      %1699 = vmatpush1.msra.mxu0 0.0
      %1700 = vmatprep.subr.mxu0 0.0
      %1701 = vmatpush1.msra.mxu0 0.0
      %1702 = vmatprep.subr.mxu0 0.0
      %1703 = vmatpush1.msra.mxu0 0.0
      %1704 = vmatprep.subr.mxu0 0.0
      %1705 = vmatpush1.msra.mxu0 0.0
      %1706 = vmatprep.subr.mxu0 0.0
      %1707 = vmatpush1.msra.mxu0 0.0
      %1708 = vmatprep.subr.mxu0 0.0
      %1709 = vmatpush1.msra.mxu0 0.0
      %1710 = vmatprep.subr.mxu0 0.0
      %1711 = vmatpush1.msra.mxu0 0.0
      %1712 = vmatprep.subr.mxu0 0.0
      %1713 = vmatpush1.msra.mxu0 0.0
      %1714 = vmatprep.subr.mxu0 0.0
      %1715 = vmatpush1.msra.mxu0 0.0
      %1716 = vmatprep.subr.mxu0 0.0
      %1717 = vmatpush1.msra.mxu0 0.0
      %1718 = vmatprep.subr.mxu0 0.0
      %1719 = vmatpush1.msra.mxu0 0.0
      %1720 = vmatprep.subr.mxu0 0.0
      %1721 = vmatpush1.msra.mxu0 0.0
      %1722 = vmatprep.subr.mxu0 0.0
      %1723 = vmatpush1.msra.mxu0 0.0
      %1724 = vmatprep.subr.mxu0 0.0
      %1725 = vmatpush1.msra.mxu0 0.0
      %1726 = vmatprep.subr.mxu0 0.0
      %1727 = vmatpush1.msra.mxu0 0.0
      %1728 = vmatprep.subr.mxu0 0.0
      %1729 = vmatpush1.msra.mxu0 0.0
      %1730 = vmatprep.mubr.f32.mxu0 0.0
      %1731 = vmatmul.mubr.f32.gmra.mrb[0].mxu0 %v1634
      %v1732 = vpop.f32.mrb[0].mxu0
      %v1733 = vadd.f32 %v1557, %v1732
      %v1734 = vpop.f32.mrb[0].mxu0
      %v1735 = vadd.f32 %v1557, %v1734
      %1736 = vmatprep.mubr.f32.mxu0 0.0
      %1737 = vmatmul.mubr.f32.gmra.mrb[0].mxu0 %v1636
      %v1738 = vpop.f32.mrb[0].mxu0
      %v1739 = vadd.f32 %v1562, %v1738
      %v1740 = vpop.f32.mrb[0].mxu0
      %v1741 = vadd.f32 %v1562, %v1740
      %1742 = vmatprep.mubr.f32.mxu0 0.0
      %1743 = vmatmul.mubr.f32.gmra.mrb[0].mxu0 %v1638
      %v1744 = vpop.f32.mrb[0].mxu0
      %v1745 = vadd.f32 %v1567, %v1744
      %v1746 = vpop.f32.mrb[0].mxu0
      %v1747 = vadd.f32 %v1567, %v1746
      %1748 = vmatprep.mubr.f32.mxu0 0.0
      %1749 = vmatmul.mubr.f32.gmra.mrb[0].mxu0 %v1640
      %v1750 = vpop.f32.mrb[0].mxu0
      %v1751 = vadd.f32 %v1572, %v1750
      %v1752 = vpop.f32.mrb[0].mxu0
      %v1753 = vadd.f32 %v1572, %v1752
      %1754 = vmatprep.mubr.f32.mxu0 0.0
      %1755 = vmatmul.mubr.f32.gmra.mrb[0].mxu0 %v1642
      %v1756 = vpop.f32.mrb[0].mxu0
      %v1757 = vadd.f32 %v1577, %v1756
      %v1758 = vpop.f32.mrb[0].mxu0
      %v1759 = vadd.f32 %v1577, %v1758
      %1760 = vmatprep.mubr.f32.mxu0 0.0
      %1761 = vmatmul.mubr.f32.gmra.mrb[0].mxu0 %v1644
      %v1762 = vpop.f32.mrb[0].mxu0
      %v1763 = vadd.f32 %v1582, %v1762
      %v1764 = vpop.f32.mrb[0].mxu0
      %v1765 = vadd.f32 %v1582, %v1764
      %1766 = vmatprep.mubr.f32.mxu0 0.0
      %1767 = vmatmul.mubr.f32.gmra.mrb[0].mxu0 %v1646
      %v1768 = vpop.f32.mrb[0].mxu0
      %v1769 = vadd.f32 %v1587, %v1768
      %v1770 = vpop.f32.mrb[0].mxu0
      %v1771 = vadd.f32 %v1587, %v1770
      %1772 = vmatprep.mubr.f32.mxu0 0.0
      %1773 = vmatmul.mubr.f32.gmra.mrb[0].mxu0 %v1648
      %v1774 = vpop.f32.mrb[0].mxu0
      %v1775 = vadd.f32 %v1592, %v1774
      %v1776 = vpop.f32.mrb[0].mxu0
      %v1777 = vadd.f32 %v1592, %v1776
      %1778 = vmatprep.mubr.f32.mxu0 0.0
      %1779 = vmatmul.mubr.f32.gmra.mrb[0].mxu0 %v1650
      %v1780 = vpop.f32.mrb[0].mxu0
      %v1781 = vadd.f32 %v1597, %v1780
      %v1782 = vpop.f32.mrb[0].mxu0
      %v1783 = vadd.f32 %v1597, %v1782
      %1784 = vmatprep.mubr.f32.mxu0 0.0
      %1785 = vmatmul.mubr.f32.gmra.mrb[0].mxu0 %v1652
      %v1786 = vpop.f32.mrb[0].mxu0
      %v1787 = vadd.f32 %v1602, %v1786
      %v1788 = vpop.f32.mrb[0].mxu0
      %v1789 = vadd.f32 %v1602, %v1788
      %1790 = vmatprep.mubr.f32.mxu0 0.0
      %1791 = vmatmul.mubr.f32.gmra.mrb[0].mxu0 %v1654
      %v1792 = vpop.f32.mrb[0].mxu0
      %v1793 = vadd.f32 %v1607, %v1792
      %v1794 = vpop.f32.mrb[0].mxu0
      %v1795 = vadd.f32 %v1607, %v1794
      %1796 = vmatprep.mubr.f32.mxu0 0.0
      %1797 = vmatmul.mubr.f32.gmra.mrb[0].mxu0 %v1656
      %v1798 = vpop.f32.mrb[0].mxu0
      %v1799 = vadd.f32 %v1612, %v1798
      %v1800 = vpop.f32.mrb[0].mxu0
      %v1801 = vadd.f32 %v1612, %v1800
      %1802 = vmatprep.mubr.f32.mxu0 0.0
      %1803 = vmatmul.mubr.f32.gmra.mrb[0].mxu0 %v1658
      %v1804 = vpop.f32.mrb[0].mxu0
      %v1805 = vadd.f32 %v1617, %v1804
      %v1806 = vpop.f32.mrb[0].mxu0
      %v1807 = vadd.f32 %v1617, %v1806
      %1808 = vmatprep.mubr.f32.mxu0 0.0
      %1809 = vmatmul.mubr.f32.gmra.mrb[0].mxu0 %v1660
      %v1810 = vpop.f32.mrb[0].mxu0
      %v1811 = vadd.f32 %v1622, %v1810
      %v1812 = vpop.f32.mrb[0].mxu0
      %v1813 = vadd.f32 %v1622, %v1812
      %1814 = vmatprep.mubr.f32.mxu0 0.0
      %1815 = vmatmul.mubr.f32.gmra.mrb[0].mxu0 %v1662
      %v1816 = vpop.f32.mrb[0].mxu0
      %v1817 = vadd.f32 %v1627, %v1816
      %v1818 = vpop.f32.mrb[0].mxu0
      %v1819 = vadd.f32 %v1627, %v1818
      %1820 = vmatprep.mubr.f32.mxu0 0.0
      %1821 = vmatmul.mubr.f32.gmra.mrb[0].mxu0 %v1664
      %v1822 = vpop.f32.mrb[0].mxu0
      %v1823 = vadd.f32 %v1632, %v1822
      %v1824 = vpop.f32.mrb[0].mxu0
      %v1825 = vadd.f32 %v1632, %v1824
      %1826 = vdwg.mxu0
      %v1827 = vmul.f32 %v1733, 0.5
      %v1828 = vmul.f32 %v1735, 0.5
      %v1829 = vmul.f32 %v1739, 0.5
      %v1830 = vmul.f32 %v1741, 0.5
      %v1831 = vmul.f32 %v1745, 0.5
      %v1832 = vmul.f32 %v1747, 0.5
      %v1833 = vmul.f32 %v1751, 0.5
      %v1834 = vmul.f32 %v1753, 0.5
      %v1835 = vmul.f32 %v1757, 0.5
      %v1836 = vmul.f32 %v1759, 0.5
      %v1837 = vmul.f32 %v1763, 0.5
      %v1838 = vmul.f32 %v1765, 0.5
      %v1839 = vmul.f32 %v1769, 0.5
      %v1840 = vmul.f32 %v1771, 0.5
      %v1841 = vmul.f32 %v1775, 0.5
      %v1842 = vmul.f32 %v1777, 0.5
      %v1843 = vmul.f32 %v1781, 0.5
      %v1844 = vmul.f32 %v1783, 0.5
      %v1845 = vmul.f32 %v1787, 0.5
      %v1846 = vmul.f32 %v1789, 0.5
      %v1847 = vmul.f32 %v1793, 0.5
      %v1848 = vmul.f32 %v1795, 0.5
      %v1849 = vmul.f32 %v1799, 0.5
      %v1850 = vmul.f32 %v1801, 0.5
      %v1851 = vmul.f32 %v1805, 0.5
      %v1852 = vmul.f32 %v1807, 0.5
      %v1853 = vmul.f32 %v1811, 0.5
      %v1854 = vmul.f32 %v1813, 0.5
      %v1855 = vmul.f32 %v1817, 0.5
      %v1856 = vmul.f32 %v1819, 0.5
      %v1857 = vmul.f32 %v1823, 0.5
      %v1858 = vmul.f32 %v1825, 0.5
      %v1859 = vmul.f32 %v1733, 0.70710677
      %v1860 = vmul.f32 %v1735, 0.70710677
      %v1861 = vmul.f32 %v1739, 0.70710677
      %v1862 = vmul.f32 %v1741, 0.70710677
      %v1863 = vmul.f32 %v1745, 0.70710677
      %v1864 = vmul.f32 %v1747, 0.70710677
      %v1865 = vmul.f32 %v1751, 0.70710677
      %v1866 = vmul.f32 %v1753, 0.70710677
      %v1867 = vmul.f32 %v1757, 0.70710677
      %v1868 = vmul.f32 %v1759, 0.70710677
      %v1869 = vmul.f32 %v1763, 0.70710677
      %v1870 = vmul.f32 %v1765, 0.70710677
      %v1871 = vmul.f32 %v1769, 0.70710677
      %v1872 = vmul.f32 %v1771, 0.70710677
      %v1873 = vmul.f32 %v1775, 0.70710677
      %v1874 = vmul.f32 %v1777, 0.70710677
      %v1875 = vmul.f32 %v1781, 0.70710677
      %v1876 = vmul.f32 %v1783, 0.70710677
      %v1877 = vmul.f32 %v1787, 0.70710677
      %v1878 = vmul.f32 %v1789, 0.70710677
      %v1879 = vmul.f32 %v1793, 0.70710677
      %v1880 = vmul.f32 %v1795, 0.70710677
      %v1881 = vmul.f32 %v1799, 0.70710677
      %v1882 = vmul.f32 %v1801, 0.70710677
      %v1883 = vmul.f32 %v1805, 0.70710677
      %v1884 = vmul.f32 %v1807, 0.70710677
      %v1885 = vmul.f32 %v1811, 0.70710677
      %v1886 = vmul.f32 %v1813, 0.70710677
      %v1887 = vmul.f32 %v1817, 0.70710677
      %v1888 = vmul.f32 %v1819, 0.70710677
      %v1889 = vmul.f32 %v1823, 0.70710677
      %v1890 = vmul.f32 %v1825, 0.70710677
      %v1891 = verf.f32.pop %v1859
      %v1892 = verf.f32.pop %v1860
      %v1893 = verf.f32.pop %v1861
      %v1894 = verf.f32.pop %v1862
      %v1895 = verf.f32.pop %v1863
      %v1896 = verf.f32.pop %v1864
      %v1897 = verf.f32.pop %v1865
      %v1898 = verf.f32.pop %v1866
      %v1899 = verf.f32.pop %v1867
      %v1900 = verf.f32.pop %v1868
      %v1901 = verf.f32.pop %v1869
      %v1902 = verf.f32.pop %v1870
      %v1903 = verf.f32.pop %v1871
      %v1904 = verf.f32.pop %v1872
      %v1905 = verf.f32.pop %v1873
      %v1906 = verf.f32.pop %v1874
      %v1907 = verf.f32.pop %v1875
      %v1908 = verf.f32.pop %v1876
      %v1909 = verf.f32.pop %v1877
      %v1910 = verf.f32.pop %v1878
      %v1911 = verf.f32.pop %v1879
      %v1912 = verf.f32.pop %v1880
      %v1913 = verf.f32.pop %v1881
      %v1914 = verf.f32.pop %v1882
      %v1915 = verf.f32.pop %v1883
      %v1916 = verf.f32.pop %v1884
      %v1917 = verf.f32.pop %v1885
      %v1918 = verf.f32.pop %v1886
      %v1919 = verf.f32.pop %v1887
      %v1920 = verf.f32.pop %v1888
      %v1921 = verf.f32.pop %v1889
      %v1922 = verf.f32.pop %v1890
      %v1923 = vadd.f32 %v1891, 1.0
      %v1924 = vadd.f32 %v1892, 1.0
      %v1925 = vadd.f32 %v1893, 1.0
      %v1926 = vadd.f32 %v1894, 1.0
      %v1927 = vadd.f32 %v1895, 1.0
      %v1928 = vadd.f32 %v1896, 1.0
      %v1929 = vadd.f32 %v1897, 1.0
      %v1930 = vadd.f32 %v1898, 1.0
      %v1931 = vadd.f32 %v1899, 1.0
      %v1932 = vadd.f32 %v1900, 1.0
      %v1933 = vadd.f32 %v1901, 1.0
      %v1934 = vadd.f32 %v1902, 1.0
      %v1935 = vadd.f32 %v1903, 1.0
      %v1936 = vadd.f32 %v1904, 1.0
      %v1937 = vadd.f32 %v1905, 1.0
      %v1938 = vadd.f32 %v1906, 1.0
      %v1939 = vadd.f32 %v1907, 1.0
      %v1940 = vadd.f32 %v1908, 1.0
      %v1941 = vadd.f32 %v1909, 1.0
      %v1942 = vadd.f32 %v1910, 1.0
      %v1943 = vadd.f32 %v1911, 1.0
      %v1944 = vadd.f32 %v1912, 1.0
      %v1945 = vadd.f32 %v1913, 1.0
      %v1946 = vadd.f32 %v1914, 1.0
      %v1947 = vadd.f32 %v1915, 1.0
      %v1948 = vadd.f32 %v1916, 1.0
      %v1949 = vadd.f32 %v1917, 1.0
      %v1950 = vadd.f32 %v1918, 1.0
      %v1951 = vadd.f32 %v1919, 1.0
      %v1952 = vadd.f32 %v1920, 1.0
      %v1953 = vadd.f32 %v1921, 1.0
      %v1954 = vadd.f32 %v1922, 1.0
      %v1955 = vmul.f32 %v1827, %v1923
      %v1956 = vmul.f32 %v1828, %v1924
      %v1957 = vmul.f32 %v1829, %v1925
      %v1958 = vmul.f32 %v1830, %v1926
      %v1959 = vmul.f32 %v1831, %v1927
      %v1960 = vmul.f32 %v1832, %v1928
      %v1961 = vmul.f32 %v1833, %v1929
      %v1962 = vmul.f32 %v1834, %v1930
      %v1963 = vmul.f32 %v1835, %v1931
      %v1964 = vmul.f32 %v1836, %v1932
      %v1965 = vmul.f32 %v1837, %v1933
      %v1966 = vmul.f32 %v1838, %v1934
      %v1967 = vmul.f32 %v1839, %v1935
      %v1968 = vmul.f32 %v1840, %v1936
      %v1969 = vmul.f32 %v1841, %v1937
      %v1970 = vmul.f32 %v1842, %v1938
      %v1971 = vmul.f32 %v1843, %v1939
      %v1972 = vmul.f32 %v1844, %v1940
      %v1973 = vmul.f32 %v1845, %v1941
      %v1974 = vmul.f32 %v1846, %v1942
      %v1975 = vmul.f32 %v1847, %v1943
      %v1976 = vmul.f32 %v1848, %v1944
      %v1977 = vmul.f32 %v1849, %v1945
      %v1978 = vmul.f32 %v1850, %v1946
      %v1979 = vmul.f32 %v1851, %v1947
      %v1980 = vmul.f32 %v1852, %v1948
      %v1981 = vmul.f32 %v1853, %v1949
      %v1982 = vmul.f32 %v1854, %v1950
      %v1983 = vmul.f32 %v1855, %v1951
      %v1984 = vmul.f32 %v1856, %v1952
      %v1985 = vmul.f32 %v1857, %v1953
      %v1986 = vmul.f32 %v1858, %v1954
      %v1987 = vld [vmem:[%s6] sm:$0xff]
      %v1988 = vld [vmem:[%s6 + $0x8] sm:$0xff]
      %v1989 = vld [vmem:[%s6 + $0x10] sm:$0xff]
      %v1990 = vld [vmem:[%s6 + $0x18] sm:$0xff]
      %1991 = vset.pattern.permute.xlu0 10
      %1992 = vperm.xlu0 %1991, %v398
      %v1993 = vpop.permute.xlu0 %1992
      %1995 = vset.pattern.permute.xlu0 10
      %1996 = vperm.xlu0 %1995, %v399
      %v1997 = vpop.permute.xlu0 %1996
      %1999 = vset.pattern.permute.xlu0 10
      %2000 = vperm.xlu0 %1999, %v400
      %v2001 = vpop.permute.xlu0 %2000
      %2003 = vset.pattern.permute.xlu0 10
      %2004 = vperm.xlu0 %2003, %v401
      %v2005 = vpop.permute.xlu0 %2004
      %2007 = vmatprep.subr.mxu0 %v1956
      %2008 = vmatpush1.msra.mxu0 %v1955
      %2009 = vmatprep.subr.mxu0 %v1958
      %2010 = vmatpush1.msra.mxu0 %v1957
      %2011 = vmatprep.subr.mxu0 %v1960
      %2012 = vmatpush1.msra.mxu0 %v1959
      %2013 = vmatprep.subr.mxu0 %v1962
      %2014 = vmatpush1.msra.mxu0 %v1961
      %2015 = vmatprep.subr.mxu0 %v1964
      %2016 = vmatpush1.msra.mxu0 %v1963
      %2017 = vmatprep.subr.mxu0 %v1966
      %2018 = vmatpush1.msra.mxu0 %v1965
      %2019 = vmatprep.subr.mxu0 %v1968
      %2020 = vmatpush1.msra.mxu0 %v1967
      %2021 = vmatprep.subr.mxu0 %v1970
      %2022 = vmatpush1.msra.mxu0 %v1969
      %2023 = vmatprep.subr.mxu0 %v1972
      %2024 = vmatpush1.msra.mxu0 %v1971
      %2025 = vmatprep.subr.mxu0 %v1974
      %2026 = vmatpush1.msra.mxu0 %v1973
      %2027 = vmatprep.subr.mxu0 %v1976
      %2028 = vmatpush1.msra.mxu0 %v1975
      %2029 = vmatprep.subr.mxu0 %v1978
      %2030 = vmatpush1.msra.mxu0 %v1977
      %2031 = vmatprep.subr.mxu0 %v1980
      %2032 = vmatpush1.msra.mxu0 %v1979
      %2033 = vmatprep.subr.mxu0 %v1982
      %2034 = vmatpush1.msra.mxu0 %v1981
      %2035 = vmatprep.subr.mxu0 %v1984
      %2036 = vmatpush1.msra.mxu0 %v1983
      %2037 = vmatprep.subr.mxu0 %v1986
      %2038 = vmatpush1.msra.mxu0 %v1985
      %2039 = vmatprep.subr.mxu0 0.0
      %2040 = vmatpush1.msra.mxu0 0.0
      %2041 = vmatprep.subr.mxu0 0.0
      %2042 = vmatpush1.msra.mxu0 0.0
      %2043 = vmatprep.subr.mxu0 0.0
      %2044 = vmatpush1.msra.mxu0 0.0
      %2045 = vmatprep.subr.mxu0 0.0
      %2046 = vmatpush1.msra.mxu0 0.0
      %2047 = vmatprep.subr.mxu0 0.0
      %2048 = vmatpush1.msra.mxu0 0.0
      %2049 = vmatprep.subr.mxu0 0.0
      %2050 = vmatpush1.msra.mxu0 0.0
      %2051 = vmatprep.subr.mxu0 0.0
      %2052 = vmatpush1.msra.mxu0 0.0
      %2053 = vmatprep.subr.mxu0 0.0
      %2054 = vmatpush1.msra.mxu0 0.0
      %2055 = vmatprep.subr.mxu0 0.0
      %2056 = vmatpush1.msra.mxu0 0.0
      %2057 = vmatprep.subr.mxu0 0.0
      %2058 = vmatpush1.msra.mxu0 0.0
      %2059 = vmatprep.subr.mxu0 0.0
      %2060 = vmatpush1.msra.mxu0 0.0
      %2061 = vmatprep.subr.mxu0 0.0
      %2062 = vmatpush1.msra.mxu0 0.0
      %2063 = vmatprep.subr.mxu0 0.0
      %2064 = vmatpush1.msra.mxu0 0.0
      %2065 = vmatprep.subr.mxu0 0.0
      %2066 = vmatpush1.msra.mxu0 0.0
      %2067 = vmatprep.subr.mxu0 0.0
      %2068 = vmatpush1.msra.mxu0 0.0
      %2069 = vmatprep.subr.mxu0 0.0
      %2070 = vmatpush1.msra.mxu0 0.0
      %2071 = vmatprep.mubr.f32.mxu0 0.0
      %2072 = vmatmul.mubr.f32.gmra.mrb[0].mxu0 %v1987
      %v2073 = vpop.f32.mrb[0].mxu0
      %v2074 = vadd.f32 %v1993, %v2073
      %v2075 = vpop.f32.mrb[0].mxu0
      %v2076 = vadd.f32 %v1993, %v2075
      %2077 = vmatprep.mubr.f32.mxu0 0.0
      %2078 = vmatmul.mubr.f32.gmra.mrb[0].mxu0 %v1988
      %v2079 = vpop.f32.mrb[0].mxu0
      %v2080 = vadd.f32 %v1997, %v2079
      %v2081 = vpop.f32.mrb[0].mxu0
      %v2082 = vadd.f32 %v1997, %v2081
      %2083 = vmatprep.mubr.f32.mxu0 0.0
      %2084 = vmatmul.mubr.f32.gmra.mrb[0].mxu0 %v1989
      %v2085 = vpop.f32.mrb[0].mxu0
      %v2086 = vadd.f32 %v2001, %v2085
      %v2087 = vpop.f32.mrb[0].mxu0
      %v2088 = vadd.f32 %v2001, %v2087
      %2089 = vmatprep.mubr.f32.mxu0 0.0
      %2090 = vmatmul.mubr.f32.gmra.mrb[0].mxu0 %v1990
      %v2091 = vpop.f32.mrb[0].mxu0
      %v2092 = vadd.f32 %v2005, %v2091
      %v2093 = vpop.f32.mrb[0].mxu0
      %v2094 = vadd.f32 %v2005, %v2093
      %2095 = vdwg.mxu0
      %v2096 = vadd.f32 %v1414, %v2074
      %v2097 = vadd.f32 %v1415, %v2076
      %v2098 = vadd.f32 %v1416, %v2080
      %v2099 = vadd.f32 %v1417, %v2082
      %v2100 = vadd.f32 %v1418, %v2086
      %v2101 = vadd.f32 %v1419, %v2088
      %v2102 = vadd.f32 %v1420, %v2092
      %v2103 = vadd.f32 %v1421, %v2094
      %v2104 = vld [vmem:[%s7] sm:$0x7]
      %2106 = vset.pattern.permute.xlu0 32
      %2107 = vperm.xlu0 %2106, %v2104
      %v2108 = vpop.permute.xlu0 %2107
      %v2110 = vsel %vm668, %v2104, 0
      %2112 = vmatprep.subr.mxu0 %v2097
      %2113 = vmatpush1.msra.mxu0 %v2096
      %2114 = vmatprep.subr.mxu0 %v2099
      %2115 = vmatpush1.msra.mxu0 %v2098
      %2116 = vmatprep.subr.mxu0 %v2101
      %2117 = vmatpush1.msra.mxu0 %v2100
      %2118 = vmatprep.subr.mxu0 %v2103
      %2119 = vmatpush1.msra.mxu0 %v2102
      %2120 = vmatprep.subr.mxu0 0.0
      %2121 = vmatpush1.msra.mxu0 0.0
      %2122 = vmatprep.subr.mxu0 0.0
      %2123 = vmatpush1.msra.mxu0 0.0
      %2124 = vmatprep.subr.mxu0 0.0
      %2125 = vmatpush1.msra.mxu0 0.0
      %2126 = vmatprep.subr.mxu0 0.0
      %2127 = vmatpush1.msra.mxu0 0.0
      %2128 = vmatprep.subr.mxu0 0.0
      %2129 = vmatpush1.msra.mxu0 0.0
      %2130 = vmatprep.subr.mxu0 0.0
      %2131 = vmatpush1.msra.mxu0 0.0
      %2132 = vmatprep.subr.mxu0 0.0
      %2133 = vmatpush1.msra.mxu0 0.0
      %2134 = vmatprep.subr.mxu0 0.0
      %2135 = vmatpush1.msra.mxu0 0.0
      %2136 = vmatprep.subr.mxu0 0.0
      %2137 = vmatpush1.msra.mxu0 0.0
      %2138 = vmatprep.subr.mxu0 0.0
      %2139 = vmatpush1.msra.mxu0 0.0
      %2140 = vmatprep.subr.mxu0 0.0
      %2141 = vmatpush1.msra.mxu0 0.0
      %2142 = vmatprep.subr.mxu0 0.0
      %2143 = vmatpush1.msra.mxu0 0.0
      %2144 = vmatprep.subr.mxu0 0.0
      %2145 = vmatpush1.msra.mxu0 0.0
      %2146 = vmatprep.subr.mxu0 0.0
      %2147 = vmatpush1.msra.mxu0 0.0
      %2148 = vmatprep.subr.mxu0 0.0
      %2149 = vmatpush1.msra.mxu0 0.0
      %2150 = vmatprep.subr.mxu0 0.0
      %2151 = vmatpush1.msra.mxu0 0.0
      %2152 = vmatprep.subr.mxu0 0.0
      %2153 = vmatpush1.msra.mxu0 0.0
      %2154 = vmatprep.subr.mxu0 0.0
      %2155 = vmatpush1.msra.mxu0 0.0
      %2156 = vmatprep.subr.mxu0 0.0
      %2157 = vmatpush1.msra.mxu0 0.0
      %2158 = vmatprep.subr.mxu0 0.0
      %2159 = vmatpush1.msra.mxu0 0.0
      %2160 = vmatprep.subr.mxu0 0.0
      %2161 = vmatpush1.msra.mxu0 0.0
      %2162 = vmatprep.subr.mxu0 0.0
      %2163 = vmatpush1.msra.mxu0 0.0
      %2164 = vmatprep.subr.mxu0 0.0
      %2165 = vmatpush1.msra.mxu0 0.0
      %2166 = vmatprep.subr.mxu0 0.0
      %2167 = vmatpush1.msra.mxu0 0.0
      %2168 = vmatprep.subr.mxu0 0.0
      %2169 = vmatpush1.msra.mxu0 0.0
      %2170 = vmatprep.subr.mxu0 0.0
      %2171 = vmatpush1.msra.mxu0 0.0
      %2172 = vmatprep.subr.mxu0 0.0
      %2173 = vmatpush1.msra.mxu0 0.0
      %2174 = vmatprep.subr.mxu0 0.0
      %2175 = vmatpush1.msra.mxu0 0.0
      %2176 = vmatprep.mubr.f32.mxu0 0.0
      %2177 = vmatmul.mubr.f32.gmra.mrb[0].mxu0 %v2110
      %v2178 = vpop.f32.mrb[0].mxu0
      %v2179 = vadd.f32 %v2108, %v2178
      %v2180 = vpop.f32.mrb[0].mxu0
      %v2181 = vadd.f32 %v2108, %v2180
      %2182 = vdwg.mxu0
      %v2185 = vcombine.low %v2179, %v2181
      %2187 = vst [vmem:[%s383] sm:$0x77] %v2185
      %s2188 = smul.u32 2, %s24
      %p2189 = scmp.lt.s32.totalorder %s23, 1
      %s2190 = scalar_select %p2189, %s23, 1
      %p2191 = scmp.lt.s32.totalorder %s2188, 1
      %s2192 = scalar_select %p2191, %s2188, 1
      %s2193 = smul.addr %s2190, 2
      %s2194 = sadd.s32 %s2192, %s2193
      %s2195 = smul.addr %s2194, 4
      %s2196 = scalar_lea.vmem %s8, %s2195
      // Predicated region
      $region53: #{tpu_custom_call.1} parent=51 // pred_check
        %p2197 = pneg %p236
      $region54: #{tpu_custom_call.1} parent=51 // pred_check_branch
        %2199 = sbr.rel (%p2197) target = $region56
      $region55: #{tpu_custom_call.1} parent=51 // pred_region
        %s2200 = smul.u32 2, %s24
      $region56: #{tpu_custom_call.1} parent=51 // pred_fallthru
        _
    $region52: #{tpu_custom_call.1} parent=5 // pred_fallthru
      _
    %p2201 = scmp.le.s32.totalorder 2, %s14
    // Predicated region
    $region57: #{tpu_custom_call.1} parent=5 // pred_check
      %p2202 = pneg %p2201
    $region58: #{tpu_custom_call.1} parent=5 // pred_check_branch
      %2204 = sbr.rel (%p2202) target = $region60
    $region59: #{tpu_custom_call.1} parent=5 // pred_region
      %s2205 = ssub.s32 %s14, 2
      // Predicated region
      $region61: #{tpu_custom_call.1} parent=59 // pred_check
        %p2206 = pneg %p242
      $region62: #{tpu_custom_call.1} parent=59 // pred_check_branch
        %2208 = sbr.rel (%p2206) target = $region64
      $region63: #{tpu_custom_call.1} parent=59 // pred_region
        %s2209 = smul.u32 2, %s26
        %p2210 = scmp.lt.s32.totalorder %s25, 1
        %s2211 = scalar_select %p2210, %s25, 1
        %p2212 = scmp.lt.s32.totalorder %s2209, 1
        %s2213 = scalar_select %p2212, %s2209, 1
        %s2214 = smul.addr %s2211, 2
        %s2215 = sadd.s32 %s2213, %s2214
        %s2216 = smul.addr %s2215, 4
        %s2217 = scalar_lea.vmem %s8, %s2216
      $region64: #{tpu_custom_call.1} parent=59 // pred_fallthru
        _
    $region60: #{tpu_custom_call.1} parent=5 // pred_fallthru
      _
  $region6: #{tpu_custom_call.1} parent=0 // loop_footer
    %s18 = sadd.s32 1, %s14
  $region7: #{tpu_custom_call.1} parent=0 // loop_footer_branch
    %13 = sbr.rel target = $region3
  $region8: #{tpu_custom_call.1} parent=0 // loop_exit
    _

</llo_original>
